<compile_context>
chip_gen: v5e
topology: v5e:2x2
jax: 0.10.0
libtpu: 0.0.40
codegen_flags: <defaults>
</compile_context>

<pallas_src>
import functools

import jax
import jax.numpy as jnp
from jax import lax
from jax.experimental import pallas as pl
from jax.experimental.pallas import tpu as pltpu


# ----------------------------- Pallas kernels ------------------------------ #

def qkv_proj_kernel(xp_ref, w_ref, b_ref, o_ref, *, t, ks):
    """Fused Q/K causal conv + V 1x1 conv projection for one batch.

    xp_ref: (1, t+ks-1, k) left-zero-padded input (time, channel).
    w_ref : (ks, k, 3*k*h) packed weights, columns ordered per head as
            [q(scaled) | k(scaled) | v] so the output slab is head-major.
    b_ref : (1, 3*k*h) packed biases (scale folded in, zeros for V).
    o_ref : (1, t, 3*k*h) packed QKV slab.
    """
    xp = xp_ref[0]                                  # (t+ks-1, k)
    acc = jnp.zeros(o_ref.shape[1:], jnp.float32)   # (t, 3*k*h)
    for j in range(ks):                             # ks unrolled taps, fused QKV
        acc = acc + jnp.dot(xp[j:j + t, :], w_ref[j],
                            preferred_element_type=jnp.float32)
    o_ref[0] = acc + b_ref[...]                     # single lane-dense store


def attn_unify_kernel(qkv_ref, wu_ref, bu_ref, o_ref, *, t, k, h,
                      mask_next, mask_diag):
    """Masked attention over all h head-groups of one batch + unifyheads Linear.

    qkv_ref: (h, t, 3*k) — for this batch, PyTorch's (b*h, t, k) "view" rows with
             q/k/v packed along the last dim.
    wu_ref : (h, k, k) per-head slices of unifyheads.weight.T.
    bu_ref : (1, k) unifyheads bias.
    o_ref  : (1, t, k) final output block for this batch.
    """
    if mask_next:
        offset = 0 if mask_diag else 1
        row = lax.broadcasted_iota(jnp.int32, (t, t), 0)
        col = lax.broadcasted_iota(jnp.int32, (t, t), 1)
        masked = col >= row + offset                # hoisted out of the head loop

    y = jnp.zeros((t, k), jnp.float32)
    for r in range(h):                              # all heads in ONE grid step
        qh = qkv_ref[r, :, 0:k]                     # (t, k)  (scale pre-folded)
        kh_ = qkv_ref[r, :, k:2 * k]                # (t, k)
        vh = qkv_ref[r, :, 2 * k:3 * k]             # (t, k)
        s = jnp.dot(qh, kh_.T, preferred_element_type=jnp.float32)   # (t, t)
        if mask_next:
            # -1e30 (not -inf) so a fully-masked row (mask_diag=True) stays finite.
            s = jnp.where(masked, -1e30, s)
        m = jnp.max(s, axis=-1, keepdims=True)
        p = jnp.exp(s - m)
        p = p / jnp.sum(p, axis=-1, keepdims=True)
        oh = jnp.dot(p, vh, preferred_element_type=jnp.float32)      # (t, k)
        # unifyheads accumulated per head -> no (h,t,k)->(t,h*k) transpose needed.
        y = y + jnp.dot(oh, wu_ref[r], preferred_element_type=jnp.float32)
    o_ref[0] = y + bu_ref[...]


# ------------------------------- wrapper ----------------------------------- #

def self_attention_conv(x, params, *, headers=8, kernel_size=3,
                        mask_next=True, mask_diag=False):
    b, t, k = x.shape
    h, ks = headers, kernel_size
    kh = k * h
    pad = ks - 1
    f32 = jnp.float32
    scale = jnp.asarray(k ** 0.25, f32)

    wq, bq = params["wq"].astype(f32), params["bq"].astype(f32)   # (kh,k,ks),(kh,)
    wk, bk = params["wk"].astype(f32), params["bk"].astype(f32)
    wv = params["wv"].astype(f32)                                  # (kh, k, 1)
    wu, bu = params["wu"].astype(f32), params["bu"].astype(f32)    # (k, kh), (k,)

    # --- trace-time weight packing: head-major columns, scale + bias folded ---
    # conv output channel c = ki*h + hi  ->  head-major column (hi, ki).
    def head_major_taps(w):                         # (kh,k,ks) -> (ks,k,h,k)
        wt = jnp.transpose(w, (2, 1, 0))            # (ks, k, kh)  [j, i, ki*h+hi]
        wt = wt.reshape(ks, k, k, h)                # [j, i, ki, hi]
        return jnp.transpose(wt, (0, 1, 3, 2))      # [j, i, hi, ki]

    wq_hm = head_major_taps(wq) / scale             # fold 1/k**0.25 into weights
    wk_hm = head_major_taps(wk) / scale
    # V is a 1x1 conv on the UNPADDED x -> only the last tap (current time) slot.
    wv_hm = jnp.transpose(wv[:, :, 0].T.reshape(k, k, h), (0, 2, 1))   # (k, h, k)
    wv_taps = jnp.zeros((ks, k, h, k), f32).at[ks - 1].set(wv_hm)
    # Interleave q/k/v per head: column = hi*3k + sel*k + ki.
    w_packed = jnp.stack([wq_hm, wk_hm, wv_taps], axis=3)   # (ks, k, h, 3, k)
    w_packed = w_packed.reshape(ks, k, 3 * kh)

    def head_major_bias(bvec):                      # (kh,) -> (h, k)
        return bvec.reshape(k, h).T

    b_packed = jnp.stack([head_major_bias(bq) / scale,
                          head_major_bias(bk) / scale,
                          jnp.zeros((h, k), f32)], axis=1).reshape(1, 3 * kh)

    wu3 = wu.T.reshape(h, k, k)                     # per-head unify weights
    bu2 = bu.reshape(1, k)

    x_pad = jnp.pad(x.astype(f32), ((0, 0), (pad, 0), (0, 0)))   # (b, t+pad, k)

    # ---- kernel 1: fused QKV projection, one grid step per batch -------------
    qkv = pl.pallas_call(
        functools.partial(qkv_proj_kernel, t=t, ks=ks),
        out_shape=jax.ShapeDtypeStruct((b, t, 3 * kh), f32),
        grid=(b,),
        in_specs=[
            pl.BlockSpec((1, t + pad, k), lambda i: (i, 0, 0)),
            pl.BlockSpec((ks, k, 3 * kh), lambda i: (0, 0, 0)),
            pl.BlockSpec((1, 3 * kh), lambda i: (0, 0)),
        ],
        out_specs=pl.BlockSpec((1, t, 3 * kh), lambda i: (i, 0, 0)),
        compiler_params=pltpu.CompilerParams(dimension_semantics=("parallel",)),
    )(x_pad, w_packed, b_packed)

    # PyTorch's (b,t,h,k).contiguous().view(b*h,t,k) batch/time mixing is a pure
    # flat-order reshape of the head-major packed slab -> free bitcast, no copy.
    qkv_mixed = qkv.reshape(b * h, t, 3 * k)

    # ---- kernel 2: attention + unifyheads, one grid step per batch -----------
    out = pl.pallas_call(
        functools.partial(attn_unify_kernel, t=t, k=k, h=h,
                          mask_next=mask_next, mask_diag=mask_diag),
        out_shape=jax.ShapeDtypeStruct((b, t, k), f32),
        grid=(b,),
        in_specs=[
            pl.BlockSpec((h, t, 3 * k), lambda i: (i, 0, 0)),
            pl.BlockSpec((h, k, k), lambda i: (0, 0, 0)),
            pl.BlockSpec((1, k), lambda i: (0, 0)),
        ],
        out_specs=pl.BlockSpec((1, t, k), lambda i: (i, 0, 0)),
        compiler_params=pltpu.CompilerParams(dimension_semantics=("parallel",)),
    )(qkv_mixed, wu3, bu2)

    return out, None


# ------------------------- pure-JAX reference ------------------------------ #

def reference(x, params, *, headers=8, kernel_size=3):
    b, t, k = x.shape
    h, ks = headers, kernel_size
    pad = ks - 1
    xT = jnp.transpose(x, (0, 2, 1))                        # (b, k, t)
    xp = jnp.pad(xT, ((0, 0), (0, 0), (pad, 0)))            # (b, k, t+pad)

    def conv1d(inp, w, bias):
        out = lax.conv_general_dilated(inp, w, (1,), "VALID",
                                       dimension_numbers=("NCH", "OIH", "NCH"))
        if bias is not None:
            out = out + bias[None, :, None]
        return out

    q = conv1d(xp, params["wq"], params["bq"]).reshape(b, k, h, t)
    key = conv1d(xp, params["wk"], params["bk"]).reshape(b, k, h, t)
    v = conv1d(xT, params["wv"], None).reshape(b, k, h, t)

    tr = lambda a: jnp.transpose(a, (0, 2, 3, 1))           # (b, h, t, k)
    q, key, v = tr(q), tr(key), tr(v)
    scale = k ** 0.25
    q, key = q / scale, key / scale
    flat = lambda a: jnp.transpose(a, (0, 2, 1, 3)).reshape(b * h, t, k)
    q, key, v = flat(q), flat(key), flat(v)

    w = jnp.einsum("bij,bkj->bik", q, key)
    mask = jnp.triu(jnp.ones((t, t), bool), 1)
    w = jnp.where(mask[None], -jnp.inf, w)
    w = jax.nn.softmax(w, axis=2)
    out = jnp.einsum("bij,bjk->bik", w, v)
    out = out.reshape(b, h, t, k)
    out = jnp.transpose(out, (0, 2, 1, 3)).reshape(b, t, k * h)
    return out @ params["wu"].T + params["bu"]


# --------------------------------- main ------------------------------------ #

if __name__ == "__main__":
    b, t, k, h, ks = 2, 8, 4, 8, 3
    kh = k * h

    root = jax.random.PRNGKey(0)
    keys = jax.random.split(root, 8)
    params = {
        "wq": 0.1 * jax.random.normal(keys[0], (kh, k, ks), jnp.float32),
        "bq": 0.1 * jax.random.normal(keys[1], (kh,), jnp.float32),
        "wk": 0.1 * jax.random.normal(keys[2], (kh, k, ks), jnp.float32),
        "bk": 0.1 * jax.random.normal(keys[3], (kh,), jnp.float32),
        "wv": 0.1 * jax.random.normal(keys[4], (kh, k, 1), jnp.float32),
        "wu": 0.1 * jax.random.normal(keys[5], (k, kh), jnp.float32),
        "bu": 0.1 * jax.random.normal(keys[6], (k,), jnp.float32),
    }
    x = jax.random.normal(keys[7], (b, t, k), jnp.float32)

    fwd = jax.jit(functools.partial(self_attention_conv, headers=h,
                                    kernel_size=ks))
    out, _ = fwd(x, params)
    out = jax.block_until_ready(out)

    ref = jax.block_until_ready(reference(x, params, headers=h, kernel_size=ks))
    assert out.shape == (b, t, k)
    assert jnp.allclose(out, ref, rtol=1e-5, atol=1e-5), (
        float(jnp.max(jnp.abs(out - ref))))

    print("KERNEL_OK")
</pallas_src>

<mosaic_0001>
module attributes {stable_mosaic.version = 11 : i64} {
  func.func @qkv_proj_kernel(%arg0: i32, %arg1: memref<1x10x4xf32, #tpu.memory_space<vmem>>, %arg2: memref<3x4x96xf32, #tpu.memory_space<vmem>>, %arg3: memref<1x96xf32, #tpu.memory_space<vmem>>, %arg4: memref<1x8x96xf32, #tpu.memory_space<vmem>>) attributes {dimension_semantics = [#tpu.dimension_semantics<parallel>], iteration_bounds = array<i64: 2>, scalar_prefetch = 0 : i64, scratch_operands = 0 : i64, tpu.core_type = #tpu.core_type<tc>, window_params = [{transform_indices = @transform_0, window_bounds = array<i64: 1, 10, 4>}, {pipeline_mode = #tpu.pipeline_mode<synchronous>, transform_indices = @transform_1, window_bounds = array<i64: 3, 4, 96>}, {pipeline_mode = #tpu.pipeline_mode<synchronous>, transform_indices = @transform_2, window_bounds = array<i64: 1, 96>}, {transform_indices = @transform_3, window_bounds = array<i64: 1, 8, 96>}]} {
    %c0 = arith.constant 0 : index
    %c0_0 = arith.constant 0 : index
    %c0_1 = arith.constant 0 : index
    %0 = vector.load %arg1[%c0, %c0_0, %c0_1] : memref<1x10x4xf32, #tpu.memory_space<vmem>>, vector<1x10x4xf32>
    %1 = vector.shape_cast %0 : vector<1x10x4xf32> to vector<10x4xf32>
    %cst = arith.constant 0.000000e+00 : f32
    %2 = vector.broadcast %cst : f32 to vector<8x96xf32>
    %3 = vector.extract_strided_slice %1 {offsets = [0, 0], sizes = [8, 4], strides = [1, 1]} : vector<10x4xf32> to vector<8x4xf32>
    %c0_2 = arith.constant 0 : index
    %c0_3 = arith.constant 0 : index
    %c0_4 = arith.constant 0 : index
    %4 = vector.load %arg2[%c0_2, %c0_3, %c0_4] : memref<3x4x96xf32, #tpu.memory_space<vmem>>, vector<1x4x96xf32>
    %5 = vector.shape_cast %4 : vector<1x4x96xf32> to vector<4x96xf32>
    %cst_5 = arith.constant dense<0.000000e+00> : vector<8x96xf32>
    %6 = tpu.matmul %3, %5, %cst_5 {dimension_numbers = #tpu.dot_dimension_numbers<[1], [0], [0], [1], [0, 0, 1, 1], [], []>} : vector<8x4xf32>, vector<4x96xf32>, vector<8x96xf32> -> vector<8x96xf32>
    %7 = arith.addf %2, %6 : vector<8x96xf32>
    %8 = vector.extract_strided_slice %1 {offsets = [1, 0], sizes = [8, 4], strides = [1, 1]} : vector<10x4xf32> to vector<8x4xf32>
    %c1 = arith.constant 1 : index
    %c0_6 = arith.constant 0 : index
    %c0_7 = arith.constant 0 : index
    %9 = vector.load %arg2[%c1, %c0_6, %c0_7] : memref<3x4x96xf32, #tpu.memory_space<vmem>>, vector<1x4x96xf32>
    %10 = vector.shape_cast %9 : vector<1x4x96xf32> to vector<4x96xf32>
    %cst_8 = arith.constant dense<0.000000e+00> : vector<8x96xf32>
    %11 = tpu.matmul %8, %10, %cst_8 {dimension_numbers = #tpu.dot_dimension_numbers<[1], [0], [0], [1], [0, 0, 1, 1], [], []>} : vector<8x4xf32>, vector<4x96xf32>, vector<8x96xf32> -> vector<8x96xf32>
    %12 = arith.addf %7, %11 : vector<8x96xf32>
    %13 = vector.extract_strided_slice %1 {offsets = [2, 0], sizes = [8, 4], strides = [1, 1]} : vector<10x4xf32> to vector<8x4xf32>
    %c2 = arith.constant 2 : index
    %c0_9 = arith.constant 0 : index
    %c0_10 = arith.constant 0 : index
    %14 = vector.load %arg2[%c2, %c0_9, %c0_10] : memref<3x4x96xf32, #tpu.memory_space<vmem>>, vector<1x4x96xf32>
    %15 = vector.shape_cast %14 : vector<1x4x96xf32> to vector<4x96xf32>
    %cst_11 = arith.constant dense<0.000000e+00> : vector<8x96xf32>
    %16 = tpu.matmul %13, %15, %cst_11 {dimension_numbers = #tpu.dot_dimension_numbers<[1], [0], [0], [1], [0, 0, 1, 1], [], []>} : vector<8x4xf32>, vector<4x96xf32>, vector<8x96xf32> -> vector<8x96xf32>
    %17 = arith.addf %12, %16 : vector<8x96xf32>
    %c0_12 = arith.constant 0 : index
    %c0_13 = arith.constant 0 : index
    %18 = vector.load %arg3[%c0_12, %c0_13] : memref<1x96xf32, #tpu.memory_space<vmem>>, vector<1x96xf32>
    %19 = vector.broadcast %18 : vector<1x96xf32> to vector<8x96xf32>
    %20 = arith.addf %17, %19 : vector<8x96xf32>
    %c0_14 = arith.constant 0 : index
    %c0_15 = arith.constant 0 : index
    %c0_16 = arith.constant 0 : index
    %21 = vector.load %arg4[%c0_14, %c0_15, %c0_16] : memref<1x8x96xf32, #tpu.memory_space<vmem>>, vector<1x8x96xf32>
    %22 = vector.shape_cast %21 : vector<1x8x96xf32> to vector<8x96xf32>
    %23 = vector.shape_cast %20 : vector<8x96xf32> to vector<1x8x96xf32>
    tpu.vector_store %arg4[%c0_14, %c0_15, %c0_16], %23 {strides = array<i32>} : memref<1x8x96xf32, #tpu.memory_space<vmem>>, vector<1x8x96xf32>,
    return
  }
  func.func @transform_0(%arg0: i32) -> (i32, i32, i32) {
    %c0_i32 = arith.constant 0 : i32
    %c0_i32_0 = arith.constant 0 : i32
    %c0_i32_1 = arith.constant 0 : i32
    return %arg0, %c0_i32, %c0_i32_0 : i32, i32, i32
  }
  func.func @transform_1(%arg0: i32) -> (i32, i32, i32) {
    %c0_i32 = arith.constant 0 : i32
    %c0_i32_0 = arith.constant 0 : i32
    %c0_i32_1 = arith.constant 0 : i32
    %c0_i32_2 = arith.constant 0 : i32
    return %c0_i32, %c0_i32_0, %c0_i32_1 : i32, i32, i32
  }
  func.func @transform_2(%arg0: i32) -> (i32, i32) {
    %c0_i32 = arith.constant 0 : i32
    %c0_i32_0 = arith.constant 0 : i32
    %c0_i32_1 = arith.constant 0 : i32
    return %c0_i32, %c0_i32_0 : i32, i32
  }
  func.func @transform_3(%arg0: i32) -> (i32, i32, i32) {
    %c0_i32 = arith.constant 0 : i32
    %c0_i32_0 = arith.constant 0 : i32
    %c0_i32_1 = arith.constant 0 : i32
    return %arg0, %c0_i32, %c0_i32_0 : i32, i32, i32
  }
}

module attributes {stable_mosaic.version = 11 : i64} {
  func.func @attn_unify_kernel(%arg0: i32, %arg1: memref<8x8x12xf32, #tpu.memory_space<vmem>>, %arg2: memref<8x4x4xf32, #tpu.memory_space<vmem>>, %arg3: memref<1x4xf32, #tpu.memory_space<vmem>>, %arg4: memref<1x8x4xf32, #tpu.memory_space<vmem>>) attributes {dimension_semantics = [#tpu.dimension_semantics<parallel>], iteration_bounds = array<i64: 2>, scalar_prefetch = 0 : i64, scratch_operands = 0 : i64, tpu.core_type = #tpu.core_type<tc>, window_params = [{transform_indices = @transform_0, window_bounds = array<i64: 8, 8, 12>}, {pipeline_mode = #tpu.pipeline_mode<synchronous>, transform_indices = @transform_1, window_bounds = array<i64: 8, 4, 4>}, {pipeline_mode = #tpu.pipeline_mode<synchronous>, transform_indices = @transform_2, window_bounds = array<i64: 1, 4>}, {transform_indices = @transform_3, window_bounds = array<i64: 1, 8, 4>}]} {
    %0 = tpu.iota {dimensions = array<i32: 0>} : vector<8x8xi32>
    %1 = tpu.iota {dimensions = array<i32: 1>} : vector<8x8xi32>
    %c1_i32 = arith.constant 1 : i32
    %2 = vector.broadcast %c1_i32 : i32 to vector<8x8xi32>
    %3 = arith.addi %0, %2 : vector<8x8xi32>
    %4 = arith.cmpi sge, %1, %3 : vector<8x8xi32>
    %cst = arith.constant 0.000000e+00 : f32
    %5 = vector.broadcast %cst : f32 to vector<8x4xf32>
    %c0 = arith.constant 0 : index
    %c0_0 = arith.constant 0 : index
    %c0_1 = arith.constant 0 : index
    %6 = vector.load %arg1[%c0, %c0_0, %c0_1] : memref<8x8x12xf32, #tpu.memory_space<vmem>>, vector<1x8x4xf32>
    %7 = vector.shape_cast %6 : vector<1x8x4xf32> to vector<8x4xf32>
    %c0_2 = arith.constant 0 : index
    %c0_3 = arith.constant 0 : index
    %c4 = arith.constant 4 : index
    %8 = vector.load %arg1[%c0_2, %c0_3, %c4] : memref<8x8x12xf32, #tpu.memory_space<vmem>>, vector<1x8x4xf32>
    %9 = vector.shape_cast %8 : vector<1x8x4xf32> to vector<8x4xf32>
    %c0_4 = arith.constant 0 : index
    %c0_5 = arith.constant 0 : index
    %c8 = arith.constant 8 : index
    %10 = vector.load %arg1[%c0_4, %c0_5, %c8] : memref<8x8x12xf32, #tpu.memory_space<vmem>>, vector<1x8x4xf32>
    %11 = vector.shape_cast %10 : vector<1x8x4xf32> to vector<8x4xf32>
    %12 = tpu.transpose %9, [1, 0] : vector<8x4xf32> -> vector<4x8xf32>
    %cst_6 = arith.constant dense<0.000000e+00> : vector<8x8xf32>
    %13 = tpu.matmul %7, %12, %cst_6 {dimension_numbers = #tpu.dot_dimension_numbers<[1], [0], [0], [1], [0, 0, 1, 1], [], []>} : vector<8x4xf32>, vector<4x8xf32>, vector<8x8xf32> -> vector<8x8xf32>
    %cst_7 = arith.constant -1.000000e+30 : f32
    %14 = vector.broadcast %cst_7 : f32 to vector<8x8xf32>
    %15 = arith.select %4, %14, %13 : vector<8x8xi1>, vector<8x8xf32>
    %cst_8 = arith.constant dense<0xFF800000> : vector<8xf32>
    %16 = vector.multi_reduction <maximumf>, %15, %cst_8 [1] : vector<8x8xf32> to vector<8xf32>
    %17 = vector.shape_cast %16 : vector<8xf32> to vector<8x1xf32>
    %18 = vector.broadcast %17 : vector<8x1xf32> to vector<8x8xf32>
    %19 = arith.subf %15, %18 : vector<8x8xf32>
    %20 = math.exp %19 : vector<8x8xf32>
    %cst_9 = arith.constant dense<0.000000e+00> : vector<8xf32>
    %21 = vector.multi_reduction <add>, %20, %cst_9 [1] : vector<8x8xf32> to vector<8xf32>
    %22 = vector.shape_cast %21 : vector<8xf32> to vector<8x1xf32>
    %23 = vector.broadcast %22 : vector<8x1xf32> to vector<8x8xf32>
    %24 = arith.divf %20, %23 : vector<8x8xf32>
    %cst_10 = arith.constant dense<0.000000e+00> : vector<8x4xf32>
    %25 = tpu.matmul %24, %11, %cst_10 {dimension_numbers = #tpu.dot_dimension_numbers<[1], [0], [0], [1], [0, 0, 1, 1], [], []>} : vector<8x8xf32>, vector<8x4xf32>, vector<8x4xf32> -> vector<8x4xf32>
    %c0_11 = arith.constant 0 : index
    %c0_12 = arith.constant 0 : index
    %c0_13 = arith.constant 0 : index
    %26 = vector.load %arg2[%c0_11, %c0_12, %c0_13] : memref<8x4x4xf32, #tpu.memory_space<vmem>>, vector<1x4x4xf32>
    %27 = vector.shape_cast %26 : vector<1x4x4xf32> to vector<4x4xf32>
    %cst_14 = arith.constant dense<0.000000e+00> : vector<8x4xf32>
    %28 = tpu.matmul %25, %27, %cst_14 {dimension_numbers = #tpu.dot_dimension_numbers<[1], [0], [0], [1], [0, 0, 1, 1], [], []>} : vector<8x4xf32>, vector<4x4xf32>, vector<8x4xf32> -> vector<8x4xf32>
    %29 = arith.addf %5, %28 : vector<8x4xf32>
    %c1 = arith.constant 1 : index
    %c0_15 = arith.constant 0 : index
    %c0_16 = arith.constant 0 : index
    %30 = vector.load %arg1[%c1, %c0_15, %c0_16] : memref<8x8x12xf32, #tpu.memory_space<vmem>>, vector<1x8x4xf32>
    %31 = vector.shape_cast %30 : vector<1x8x4xf32> to vector<8x4xf32>
    %c1_17 = arith.constant 1 : index
    %c0_18 = arith.constant 0 : index
    %c4_19 = arith.constant 4 : index
    %32 = vector.load %arg1[%c1_17, %c0_18, %c4_19] : memref<8x8x12xf32, #tpu.memory_space<vmem>>, vector<1x8x4xf32>
    %33 = vector.shape_cast %32 : vector<1x8x4xf32> to vector<8x4xf32>
    %c1_20 = arith.constant 1 : index
    %c0_21 = arith.constant 0 : index
    %c8_22 = arith.constant 8 : index
    %34 = vector.load %arg1[%c1_20, %c0_21, %c8_22] : memref<8x8x12xf32, #tpu.memory_space<vmem>>, vector<1x8x4xf32>
    %35 = vector.shape_cast %34 : vector<1x8x4xf32> to vector<8x4xf32>
    %36 = tpu.transpose %33, [1, 0] : vector<8x4xf32> -> vector<4x8xf32>
    %cst_23 = arith.constant dense<0.000000e+00> : vector<8x8xf32>
    %37 = tpu.matmul %31, %36, %cst_23 {dimension_numbers = #tpu.dot_dimension_numbers<[1], [0], [0], [1], [0, 0, 1, 1], [], []>} : vector<8x4xf32>, vector<4x8xf32>, vector<8x8xf32> -> vector<8x8xf32>
    %cst_24 = arith.constant -1.000000e+30 : f32
    %38 = vector.broadcast %cst_24 : f32 to vector<8x8xf32>
    %39 = arith.select %4, %38, %37 : vector<8x8xi1>, vector<8x8xf32>
    %cst_25 = arith.constant dense<0xFF800000> : vector<8xf32>
    %40 = vector.multi_reduction <maximumf>, %39, %cst_25 [1] : vector<8x8xf32> to vector<8xf32>
    %41 = vector.shape_cast %40 : vector<8xf32> to vector<8x1xf32>
    %42 = vector.broadcast %41 : vector<8x1xf32> to vector<8x8xf32>
    %43 = arith.subf %39, %42 : vector<8x8xf32>
    %44 = math.exp %43 : vector<8x8xf32>
    %cst_26 = arith.constant dense<0.000000e+00> : vector<8xf32>
    %45 = vector.multi_reduction <add>, %44, %cst_26 [1] : vector<8x8xf32> to vector<8xf32>
    %46 = vector.shape_cast %45 : vector<8xf32> to vector<8x1xf32>
    %47 = vector.broadcast %46 : vector<8x1xf32> to vector<8x8xf32>
    %48 = arith.divf %44, %47 : vector<8x8xf32>
    %cst_27 = arith.constant dense<0.000000e+00> : vector<8x4xf32>
    %49 = tpu.matmul %48, %35, %cst_27 {dimension_numbers = #tpu.dot_dimension_numbers<[1], [0], [0], [1], [0, 0, 1, 1], [], []>} : vector<8x8xf32>, vector<8x4xf32>, vector<8x4xf32> -> vector<8x4xf32>
    %c1_28 = arith.constant 1 : index
    %c0_29 = arith.constant 0 : index
    %c0_30 = arith.constant 0 : index
    %50 = vector.load %arg2[%c1_28, %c0_29, %c0_30] : memref<8x4x4xf32, #tpu.memory_space<vmem>>, vector<1x4x4xf32>
    %51 = vector.shape_cast %50 : vector<1x4x4xf32> to vector<4x4xf32>
    %cst_31 = arith.constant dense<0.000000e+00> : vector<8x4xf32>
    %52 = tpu.matmul %49, %51, %cst_31 {dimension_numbers = #tpu.dot_dimension_numbers<[1], [0], [0], [1], [0, 0, 1, 1], [], []>} : vector<8x4xf32>, vector<4x4xf32>, vector<8x4xf32> -> vector<8x4xf32>
    %53 = arith.addf %29, %52 : vector<8x4xf32>
    %c2 = arith.constant 2 : index
    %c0_32 = arith.constant 0 : index
    %c0_33 = arith.constant 0 : index
    %54 = vector.load %arg1[%c2, %c0_32, %c0_33] : memref<8x8x12xf32, #tpu.memory_space<vmem>>, vector<1x8x4xf32>
    %55 = vector.shape_cast %54 : vector<1x8x4xf32> to vector<8x4xf32>
    %c2_34 = arith.constant 2 : index
    %c0_35 = arith.constant 0 : index
    %c4_36 = arith.constant 4 : index
    %56 = vector.load %arg1[%c2_34, %c0_35, %c4_36] : memref<8x8x12xf32, #tpu.memory_space<vmem>>, vector<1x8x4xf32>
    %57 = vector.shape_cast %56 : vector<1x8x4xf32> to vector<8x4xf32>
    %c2_37 = arith.constant 2 : index
    %c0_38 = arith.constant 0 : index
    %c8_39 = arith.constant 8 : index
    %58 = vector.load %arg1[%c2_37, %c0_38, %c8_39] : memref<8x8x12xf32, #tpu.memory_space<vmem>>, vector<1x8x4xf32>
    %59 = vector.shape_cast %58 : vector<1x8x4xf32> to vector<8x4xf32>
    %60 = tpu.transpose %57, [1, 0] : vector<8x4xf32> -> vector<4x8xf32>
    %cst_40 = arith.constant dense<0.000000e+00> : vector<8x8xf32>
    %61 = tpu.matmul %55, %60, %cst_40 {dimension_numbers = #tpu.dot_dimension_numbers<[1], [0], [0], [1], [0, 0, 1, 1], [], []>} : vector<8x4xf32>, vector<4x8xf32>, vector<8x8xf32> -> vector<8x8xf32>
    %cst_41 = arith.constant -1.000000e+30 : f32
    %62 = vector.broadcast %cst_41 : f32 to vector<8x8xf32>
    %63 = arith.select %4, %62, %61 : vector<8x8xi1>, vector<8x8xf32>
    %cst_42 = arith.constant dense<0xFF800000> : vector<8xf32>
    %64 = vector.multi_reduction <maximumf>, %63, %cst_42 [1] : vector<8x8xf32> to vector<8xf32>
    %65 = vector.shape_cast %64 : vector<8xf32> to vector<8x1xf32>
    %66 = vector.broadcast %65 : vector<8x1xf32> to vector<8x8xf32>
    %67 = arith.subf %63, %66 : vector<8x8xf32>
    %68 = math.exp %67 : vector<8x8xf32>
    %cst_43 = arith.constant dense<0.000000e+00> : vector<8xf32>
    %69 = vector.multi_reduction <add>, %68, %cst_43 [1] : vector<8x8xf32> to vector<8xf32>
    %70 = vector.shape_cast %69 : vector<8xf32> to vector<8x1xf32>
    %71 = vector.broadcast %70 : vector<8x1xf32> to vector<8x8xf32>
    %72 = arith.divf %68, %71 : vector<8x8xf32>
    %cst_44 = arith.constant dense<0.000000e+00> : vector<8x4xf32>
    %73 = tpu.matmul %72, %59, %cst_44 {dimension_numbers = #tpu.dot_dimension_numbers<[1], [0], [0], [1], [0, 0, 1, 1], [], []>} : vector<8x8xf32>, vector<8x4xf32>, vector<8x4xf32> -> vector<8x4xf32>
    %c2_45 = arith.constant 2 : index
    %c0_46 = arith.constant 0 : index
    %c0_47 = arith.constant 0 : index
    %74 = vector.load %arg2[%c2_45, %c0_46, %c0_47] : memref<8x4x4xf32, #tpu.memory_space<vmem>>, vector<1x4x4xf32>
    %75 = vector.shape_cast %74 : vector<1x4x4xf32> to vector<4x4xf32>
    %cst_48 = arith.constant dense<0.000000e+00> : vector<8x4xf32>
    %76 = tpu.matmul %73, %75, %cst_48 {dimension_numbers = #tpu.dot_dimension_numbers<[1], [0], [0], [1], [0, 0, 1, 1], [], []>} : vector<8x4xf32>, vector<4x4xf32>, vector<8x4xf32> -> vector<8x4xf32>
    %77 = arith.addf %53, %76 : vector<8x4xf32>
    %c3 = arith.constant 3 : index
    %c0_49 = arith.constant 0 : index
    %c0_50 = arith.constant 0 : index
    %78 = vector.load %arg1[%c3, %c0_49, %c0_50] : memref<8x8x12xf32, #tpu.memory_space<vmem>>, vector<1x8x4xf32>
    %79 = vector.shape_cast %78 : vector<1x8x4xf32> to vector<8x4xf32>
    %c3_51 = arith.constant 3 : index
    %c0_52 = arith.constant 0 : index
    %c4_53 = arith.constant 4 : index
    %80 = vector.load %arg1[%c3_51, %c0_52, %c4_53] : memref<8x8x12xf32, #tpu.memory_space<vmem>>, vector<1x8x4xf32>
    %81 = vector.shape_cast %80 : vector<1x8x4xf32> to vector<8x4xf32>
    %c3_54 = arith.constant 3 : index
    %c0_55 = arith.constant 0 : index
    %c8_56 = arith.constant 8 : index
    %82 = vector.load %arg1[%c3_54, %c0_55, %c8_56] : memref<8x8x12xf32, #tpu.memory_space<vmem>>, vector<1x8x4xf32>
    %83 = vector.shape_cast %82 : vector<1x8x4xf32> to vector<8x4xf32>
    %84 = tpu.transpose %81, [1, 0] : vector<8x4xf32> -> vector<4x8xf32>
    %cst_57 = arith.constant dense<0.000000e+00> : vector<8x8xf32>
    %85 = tpu.matmul %79, %84, %cst_57 {dimension_numbers = #tpu.dot_dimension_numbers<[1], [0], [0], [1], [0, 0, 1, 1], [], []>} : vector<8x4xf32>, vector<4x8xf32>, vector<8x8xf32> -> vector<8x8xf32>
    %cst_58 = arith.constant -1.000000e+30 : f32
    %86 = vector.broadcast %cst_58 : f32 to vector<8x8xf32>
    %87 = arith.select %4, %86, %85 : vector<8x8xi1>, vector<8x8xf32>
    %cst_59 = arith.constant dense<0xFF800000> : vector<8xf32>
    %88 = vector.multi_reduction <maximumf>, %87, %cst_59 [1] : vector<8x8xf32> to vector<8xf32>
    %89 = vector.shape_cast %88 : vector<8xf32> to vector<8x1xf32>
    %90 = vector.broadcast %89 : vector<8x1xf32> to vector<8x8xf32>
    %91 = arith.subf %87, %90 : vector<8x8xf32>
    %92 = math.exp %91 : vector<8x8xf32>
    %cst_60 = arith.constant dense<0.000000e+00> : vector<8xf32>
    %93 = vector.multi_reduction <add>, %92, %cst_60 [1] : vector<8x8xf32> to vector<8xf32>
    %94 = vector.shape_cast %93 : vector<8xf32> to vector<8x1xf32>
    %95 = vector.broadcast %94 : vector<8x1xf32> to vector<8x8xf32>
    %96 = arith.divf %92, %95 : vector<8x8xf32>
    %cst_61 = arith.constant dense<0.000000e+00> : vector<8x4xf32>
    %97 = tpu.matmul %96, %83, %cst_61 {dimension_numbers = #tpu.dot_dimension_numbers<[1], [0], [0], [1], [0, 0, 1, 1], [], []>} : vector<8x8xf32>, vector<8x4xf32>, vector<8x4xf32> -> vector<8x4xf32>
    %c3_62 = arith.constant 3 : index
    %c0_63 = arith.constant 0 : index
    %c0_64 = arith.constant 0 : index
    %98 = vector.load %arg2[%c3_62, %c0_63, %c0_64] : memref<8x4x4xf32, #tpu.memory_space<vmem>>, vector<1x4x4xf32>
    %99 = vector.shape_cast %98 : vector<1x4x4xf32> to vector<4x4xf32>
    %cst_65 = arith.constant dense<0.000000e+00> : vector<8x4xf32>
    %100 = tpu.matmul %97, %99, %cst_65 {dimension_numbers = #tpu.dot_dimension_numbers<[1], [0], [0], [1], [0, 0, 1, 1], [], []>} : vector<8x4xf32>, vector<4x4xf32>, vector<8x4xf32> -> vector<8x4xf32>
    %101 = arith.addf %77, %100 : vector<8x4xf32>
    %c4_66 = arith.constant 4 : index
    %c0_67 = arith.constant 0 : index
    %c0_68 = arith.constant 0 : index
    %102 = vector.load %arg1[%c4_66, %c0_67, %c0_68] : memref<8x8x12xf32, #tpu.memory_space<vmem>>, vector<1x8x4xf32>
    %103 = vector.shape_cast %102 : vector<1x8x4xf32> to vector<8x4xf32>
    %c4_69 = arith.constant 4 : index
    %c0_70 = arith.constant 0 : index
    %c4_71 = arith.constant 4 : index
    %104 = vector.load %arg1[%c4_69, %c0_70, %c4_71] : memref<8x8x12xf32, #tpu.memory_space<vmem>>, vector<1x8x4xf32>
    %105 = vector.shape_cast %104 : vector<1x8x4xf32> to vector<8x4xf32>
    %c4_72 = arith.constant 4 : index
    %c0_73 = arith.constant 0 : index
    %c8_74 = arith.constant 8 : index
    %106 = vector.load %arg1[%c4_72, %c0_73, %c8_74] : memref<8x8x12xf32, #tpu.memory_space<vmem>>, vector<1x8x4xf32>
    %107 = vector.shape_cast %106 : vector<1x8x4xf32> to vector<8x4xf32>
    %108 = tpu.transpose %105, [1, 0] : vector<8x4xf32> -> vector<4x8xf32>
    %cst_75 = arith.constant dense<0.000000e+00> : vector<8x8xf32>
    %109 = tpu.matmul %103, %108, %cst_75 {dimension_numbers = #tpu.dot_dimension_numbers<[1], [0], [0], [1], [0, 0, 1, 1], [], []>} : vector<8x4xf32>, vector<4x8xf32>, vector<8x8xf32> -> vector<8x8xf32>
    %cst_76 = arith.constant -1.000000e+30 : f32
    %110 = vector.broadcast %cst_76 : f32 to vector<8x8xf32>
    %111 = arith.select %4, %110, %109 : vector<8x8xi1>, vector<8x8xf32>
    %cst_77 = arith.constant dense<0xFF800000> : vector<8xf32>
    %112 = vector.multi_reduction <maximumf>, %111, %cst_77 [1] : vector<8x8xf32> to vector<8xf32>
    %113 = vector.shape_cast %112 : vector<8xf32> to vector<8x1xf32>
    %114 = vector.broadcast %113 : vector<8x1xf32> to vector<8x8xf32>
    %115 = arith.subf %111, %114 : vector<8x8xf32>
    %116 = math.exp %115 : vector<8x8xf32>
    %cst_78 = arith.constant dense<0.000000e+00> : vector<8xf32>
    %117 = vector.multi_reduction <add>, %116, %cst_78 [1] : vector<8x8xf32> to vector<8xf32>
    %118 = vector.shape_cast %117 : vector<8xf32> to vector<8x1xf32>
    %119 = vector.broadcast %118 : vector<8x1xf32> to vector<8x8xf32>
    %120 = arith.divf %116, %119 : vector<8x8xf32>
    %cst_79 = arith.constant dense<0.000000e+00> : vector<8x4xf32>
    %121 = tpu.matmul %120, %107, %cst_79 {dimension_numbers = #tpu.dot_dimension_numbers<[1], [0], [0], [1], [0, 0, 1, 1], [], []>} : vector<8x8xf32>, vector<8x4xf32>, vector<8x4xf32> -> vector<8x4xf32>
    %c4_80 = arith.constant 4 : index
    %c0_81 = arith.constant 0 : index
    %c0_82 = arith.constant 0 : index
    %122 = vector.load %arg2[%c4_80, %c0_81, %c0_82] : memref<8x4x4xf32, #tpu.memory_space<vmem>>, vector<1x4x4xf32>
    %123 = vector.shape_cast %122 : vector<1x4x4xf32> to vector<4x4xf32>
    %cst_83 = arith.constant dense<0.000000e+00> : vector<8x4xf32>
    %124 = tpu.matmul %121, %123, %cst_83 {dimension_numbers = #tpu.dot_dimension_numbers<[1], [0], [0], [1], [0, 0, 1, 1], [], []>} : vector<8x4xf32>, vector<4x4xf32>, vector<8x4xf32> -> vector<8x4xf32>
    %125 = arith.addf %101, %124 : vector<8x4xf32>
    %c5 = arith.constant 5 : index
    %c0_84 = arith.constant 0 : index
    %c0_85 = arith.constant 0 : index
    %126 = vector.load %arg1[%c5, %c0_84, %c0_85] : memref<8x8x12xf32, #tpu.memory_space<vmem>>, vector<1x8x4xf32>
    %127 = vector.shape_cast %126 : vector<1x8x4xf32> to vector<8x4xf32>
    %c5_86 = arith.constant 5 : index
    %c0_87 = arith.constant 0 : index
    %c4_88 = arith.constant 4 : index
    %128 = vector.load %arg1[%c5_86, %c0_87, %c4_88] : memref<8x8x12xf32, #tpu.memory_space<vmem>>, vector<1x8x4xf32>
    %129 = vector.shape_cast %128 : vector<1x8x4xf32> to vector<8x4xf32>
    %c5_89 = arith.constant 5 : index
    %c0_90 = arith.constant 0 : index
    %c8_91 = arith.constant 8 : index
    %130 = vector.load %arg1[%c5_89, %c0_90, %c8_91] : memref<8x8x12xf32, #tpu.memory_space<vmem>>, vector<1x8x4xf32>
    %131 = vector.shape_cast %130 : vector<1x8x4xf32> to vector<8x4xf32>
    %132 = tpu.transpose %129, [1, 0] : vector<8x4xf32> -> vector<4x8xf32>
    %cst_92 = arith.constant dense<0.000000e+00> : vector<8x8xf32>
    %133 = tpu.matmul %127, %132, %cst_92 {dimension_numbers = #tpu.dot_dimension_numbers<[1], [0], [0], [1], [0, 0, 1, 1], [], []>} : vector<8x4xf32>, vector<4x8xf32>, vector<8x8xf32> -> vector<8x8xf32>
    %cst_93 = arith.constant -1.000000e+30 : f32
    %134 = vector.broadcast %cst_93 : f32 to vector<8x8xf32>
    %135 = arith.select %4, %134, %133 : vector<8x8xi1>, vector<8x8xf32>
    %cst_94 = arith.constant dense<0xFF800000> : vector<8xf32>
    %136 = vector.multi_reduction <maximumf>, %135, %cst_94 [1] : vector<8x8xf32> to vector<8xf32>
    %137 = vector.shape_cast %136 : vector<8xf32> to vector<8x1xf32>
    %138 = vector.broadcast %137 : vector<8x1xf32> to vector<8x8xf32>
    %139 = arith.subf %135, %138 : vector<8x8xf32>
    %140 = math.exp %139 : vector<8x8xf32>
    %cst_95 = arith.constant dense<0.000000e+00> : vector<8xf32>
    %141 = vector.multi_reduction <add>, %140, %cst_95 [1] : vector<8x8xf32> to vector<8xf32>
    %142 = vector.shape_cast %141 : vector<8xf32> to vector<8x1xf32>
    %143 = vector.broadcast %142 : vector<8x1xf32> to vector<8x8xf32>
    %144 = arith.divf %140, %143 : vector<8x8xf32>
    %cst_96 = arith.constant dense<0.000000e+00> : vector<8x4xf32>
    %145 = tpu.matmul %144, %131, %cst_96 {dimension_numbers = #tpu.dot_dimension_numbers<[1], [0], [0], [1], [0, 0, 1, 1], [], []>} : vector<8x8xf32>, vector<8x4xf32>, vector<8x4xf32> -> vector<8x4xf32>
    %c5_97 = arith.constant 5 : index
    %c0_98 = arith.constant 0 : index
    %c0_99 = arith.constant 0 : index
    %146 = vector.load %arg2[%c5_97, %c0_98, %c0_99] : memref<8x4x4xf32, #tpu.memory_space<vmem>>, vector<1x4x4xf32>
    %147 = vector.shape_cast %146 : vector<1x4x4xf32> to vector<4x4xf32>
    %cst_100 = arith.constant dense<0.000000e+00> : vector<8x4xf32>
    %148 = tpu.matmul %145, %147, %cst_100 {dimension_numbers = #tpu.dot_dimension_numbers<[1], [0], [0], [1], [0, 0, 1, 1], [], []>} : vector<8x4xf32>, vector<4x4xf32>, vector<8x4xf32> -> vector<8x4xf32>
    %149 = arith.addf %125, %148 : vector<8x4xf32>
    %c6 = arith.constant 6 : index
    %c0_101 = arith.constant 0 : index
    %c0_102 = arith.constant 0 : index
    %150 = vector.load %arg1[%c6, %c0_101, %c0_102] : memref<8x8x12xf32, #tpu.memory_space<vmem>>, vector<1x8x4xf32>
    %151 = vector.shape_cast %150 : vector<1x8x4xf32> to vector<8x4xf32>
    %c6_103 = arith.constant 6 : index
    %c0_104 = arith.constant 0 : index
    %c4_105 = arith.constant 4 : index
    %152 = vector.load %arg1[%c6_103, %c0_104, %c4_105] : memref<8x8x12xf32, #tpu.memory_space<vmem>>, vector<1x8x4xf32>
    %153 = vector.shape_cast %152 : vector<1x8x4xf32> to vector<8x4xf32>
    %c6_106 = arith.constant 6 : index
    %c0_107 = arith.constant 0 : index
    %c8_108 = arith.constant 8 : index
    %154 = vector.load %arg1[%c6_106, %c0_107, %c8_108] : memref<8x8x12xf32, #tpu.memory_space<vmem>>, vector<1x8x4xf32>
    %155 = vector.shape_cast %154 : vector<1x8x4xf32> to vector<8x4xf32>
    %156 = tpu.transpose %153, [1, 0] : vector<8x4xf32> -> vector<4x8xf32>
    %cst_109 = arith.constant dense<0.000000e+00> : vector<8x8xf32>
    %157 = tpu.matmul %151, %156, %cst_109 {dimension_numbers = #tpu.dot_dimension_numbers<[1], [0], [0], [1], [0, 0, 1, 1], [], []>} : vector<8x4xf32>, vector<4x8xf32>, vector<8x8xf32> -> vector<8x8xf32>
    %cst_110 = arith.constant -1.000000e+30 : f32
    %158 = vector.broadcast %cst_110 : f32 to vector<8x8xf32>
    %159 = arith.select %4, %158, %157 : vector<8x8xi1>, vector<8x8xf32>
    %cst_111 = arith.constant dense<0xFF800000> : vector<8xf32>
    %160 = vector.multi_reduction <maximumf>, %159, %cst_111 [1] : vector<8x8xf32> to vector<8xf32>
    %161 = vector.shape_cast %160 : vector<8xf32> to vector<8x1xf32>
    %162 = vector.broadcast %161 : vector<8x1xf32> to vector<8x8xf32>
    %163 = arith.subf %159, %162 : vector<8x8xf32>
    %164 = math.exp %163 : vector<8x8xf32>
    %cst_112 = arith.constant dense<0.000000e+00> : vector<8xf32>
    %165 = vector.multi_reduction <add>, %164, %cst_112 [1] : vector<8x8xf32> to vector<8xf32>
    %166 = vector.shape_cast %165 : vector<8xf32> to vector<8x1xf32>
    %167 = vector.broadcast %166 : vector<8x1xf32> to vector<8x8xf32>
    %168 = arith.divf %164, %167 : vector<8x8xf32>
    %cst_113 = arith.constant dense<0.000000e+00> : vector<8x4xf32>
    %169 = tpu.matmul %168, %155, %cst_113 {dimension_numbers = #tpu.dot_dimension_numbers<[1], [0], [0], [1], [0, 0, 1, 1], [], []>} : vector<8x8xf32>, vector<8x4xf32>, vector<8x4xf32> -> vector<8x4xf32>
    %c6_114 = arith.constant 6 : index
    %c0_115 = arith.constant 0 : index
    %c0_116 = arith.constant 0 : index
    %170 = vector.load %arg2[%c6_114, %c0_115, %c0_116] : memref<8x4x4xf32, #tpu.memory_space<vmem>>, vector<1x4x4xf32>
    %171 = vector.shape_cast %170 : vector<1x4x4xf32> to vector<4x4xf32>
    %cst_117 = arith.constant dense<0.000000e+00> : vector<8x4xf32>
    %172 = tpu.matmul %169, %171, %cst_117 {dimension_numbers = #tpu.dot_dimension_numbers<[1], [0], [0], [1], [0, 0, 1, 1], [], []>} : vector<8x4xf32>, vector<4x4xf32>, vector<8x4xf32> -> vector<8x4xf32>
    %173 = arith.addf %149, %172 : vector<8x4xf32>
    %c7 = arith.constant 7 : index
    %c0_118 = arith.constant 0 : index
    %c0_119 = arith.constant 0 : index
    %174 = vector.load %arg1[%c7, %c0_118, %c0_119] : memref<8x8x12xf32, #tpu.memory_space<vmem>>, vector<1x8x4xf32>
    %175 = vector.shape_cast %174 : vector<1x8x4xf32> to vector<8x4xf32>
    %c7_120 = arith.constant 7 : index
    %c0_121 = arith.constant 0 : index
    %c4_122 = arith.constant 4 : index
    %176 = vector.load %arg1[%c7_120, %c0_121, %c4_122] : memref<8x8x12xf32, #tpu.memory_space<vmem>>, vector<1x8x4xf32>
    %177 = vector.shape_cast %176 : vector<1x8x4xf32> to vector<8x4xf32>
    %c7_123 = arith.constant 7 : index
    %c0_124 = arith.constant 0 : index
    %c8_125 = arith.constant 8 : index
    %178 = vector.load %arg1[%c7_123, %c0_124, %c8_125] : memref<8x8x12xf32, #tpu.memory_space<vmem>>, vector<1x8x4xf32>
    %179 = vector.shape_cast %178 : vector<1x8x4xf32> to vector<8x4xf32>
    %180 = tpu.transpose %177, [1, 0] : vector<8x4xf32> -> vector<4x8xf32>
    %cst_126 = arith.constant dense<0.000000e+00> : vector<8x8xf32>
    %181 = tpu.matmul %175, %180, %cst_126 {dimension_numbers = #tpu.dot_dimension_numbers<[1], [0], [0], [1], [0, 0, 1, 1], [], []>} : vector<8x4xf32>, vector<4x8xf32>, vector<8x8xf32> -> vector<8x8xf32>
    %cst_127 = arith.constant -1.000000e+30 : f32
    %182 = vector.broadcast %cst_127 : f32 to vector<8x8xf32>
    %183 = arith.select %4, %182, %181 : vector<8x8xi1>, vector<8x8xf32>
    %cst_128 = arith.constant dense<0xFF800000> : vector<8xf32>
    %184 = vector.multi_reduction <maximumf>, %183, %cst_128 [1] : vector<8x8xf32> to vector<8xf32>
    %185 = vector.shape_cast %184 : vector<8xf32> to vector<8x1xf32>
    %186 = vector.broadcast %185 : vector<8x1xf32> to vector<8x8xf32>
    %187 = arith.subf %183, %186 : vector<8x8xf32>
    %188 = math.exp %187 : vector<8x8xf32>
    %cst_129 = arith.constant dense<0.000000e+00> : vector<8xf32>
    %189 = vector.multi_reduction <add>, %188, %cst_129 [1] : vector<8x8xf32> to vector<8xf32>
    %190 = vector.shape_cast %189 : vector<8xf32> to vector<8x1xf32>
    %191 = vector.broadcast %190 : vector<8x1xf32> to vector<8x8xf32>
    %192 = arith.divf %188, %191 : vector<8x8xf32>
    %cst_130 = arith.constant dense<0.000000e+00> : vector<8x4xf32>
    %193 = tpu.matmul %192, %179, %cst_130 {dimension_numbers = #tpu.dot_dimension_numbers<[1], [0], [0], [1], [0, 0, 1, 1], [], []>} : vector<8x8xf32>, vector<8x4xf32>, vector<8x4xf32> -> vector<8x4xf32>
    %c7_131 = arith.constant 7 : index
    %c0_132 = arith.constant 0 : index
    %c0_133 = arith.constant 0 : index
    %194 = vector.load %arg2[%c7_131, %c0_132, %c0_133] : memref<8x4x4xf32, #tpu.memory_space<vmem>>, vector<1x4x4xf32>
    %195 = vector.shape_cast %194 : vector<1x4x4xf32> to vector<4x4xf32>
    %cst_134 = arith.constant dense<0.000000e+00> : vector<8x4xf32>
    %196 = tpu.matmul %193, %195, %cst_134 {dimension_numbers = #tpu.dot_dimension_numbers<[1], [0], [0], [1], [0, 0, 1, 1], [], []>} : vector<8x4xf32>, vector<4x4xf32>, vector<8x4xf32> -> vector<8x4xf32>
    %197 = arith.addf %173, %196 : vector<8x4xf32>
    %c0_135 = arith.constant 0 : index
    %c0_136 = arith.constant 0 : index
    %198 = vector.load %arg3[%c0_135, %c0_136] : memref<1x4xf32, #tpu.memory_space<vmem>>, vector<1x4xf32>
    %199 = vector.broadcast %198 : vector<1x4xf32> to vector<8x4xf32>
    %200 = arith.addf %197, %199 : vector<8x4xf32>
    %c0_137 = arith.constant 0 : index
    %c0_138 = arith.constant 0 : index
    %c0_139 = arith.constant 0 : index
    %201 = vector.load %arg4[%c0_137, %c0_138, %c0_139] : memref<1x8x4xf32, #tpu.memory_space<vmem>>, vector<1x8x4xf32>
    %202 = vector.shape_cast %201 : vector<1x8x4xf32> to vector<8x4xf32>
    %203 = vector.shape_cast %200 : vector<8x4xf32> to vector<1x8x4xf32>
    tpu.vector_store %arg4[%c0_137, %c0_138, %c0_139], %203 {strides = array<i32>} : memref<1x8x4xf32, #tpu.memory_space<vmem>>, vector<1x8x4xf32>,
    return
  }
  func.func @transform_0(%arg0: i32) -> (i32, i32, i32) {
    %c0_i32 = arith.constant 0 : i32
    %c0_i32_0 = arith.constant 0 : i32
    %c0_i32_1 = arith.constant 0 : i32
    return %arg0, %c0_i32, %c0_i32_0 : i32, i32, i32
  }
  func.func @transform_1(%arg0: i32) -> (i32, i32, i32) {
    %c0_i32 = arith.constant 0 : i32
    %c0_i32_0 = arith.constant 0 : i32
    %c0_i32_1 = arith.constant 0 : i32
    %c0_i32_2 = arith.constant 0 : i32
    return %c0_i32, %c0_i32_0, %c0_i32_1 : i32, i32, i32
  }
  func.func @transform_2(%arg0: i32) -> (i32, i32) {
    %c0_i32 = arith.constant 0 : i32
    %c0_i32_0 = arith.constant 0 : i32
    %c0_i32_1 = arith.constant 0 : i32
    return %c0_i32, %c0_i32_0 : i32, i32
  }
  func.func @transform_3(%arg0: i32) -> (i32, i32, i32) {
    %c0_i32 = arith.constant 0 : i32
    %c0_i32_0 = arith.constant 0 : i32
    %c0_i32_1 = arith.constant 0 : i32
    return %arg0, %c0_i32, %c0_i32_0 : i32, i32, i32
  }
}

</mosaic_0001>

<llo_original>
// kernel: self_attention_conv.2
$region0: #{self_attention_conv.2}
  #allocation0 [shape = 'u32[]', space=smem, size = 0x4, offset = 0x4, fixed_abs, tag = 'smem constant byte address 0x4 - core index']
  #allocation1 [shape = 'u32[72,128]{1,0:T(1,128)}', space=vmem, size = 0x9000, scoped, tag = 'internal scratch']
  %s0 = inlined_call_operand.vmem [shape: f32[2,10,4], index: 0, kind: input, shape index: {}]
  %s1 = inlined_call_operand.vmem [shape: f32[3,4,96], index: 1, kind: input, shape index: {}]
  %s2 = inlined_call_operand.vmem [shape: f32[1,96], index: 2, kind: input, shape index: {}]
  %s3 = inlined_call_operand.vmem [shape: f32[2,8,96], index: 3, kind: output, shape index: {}]
  %s4 = sld [smem:[#allocation0]]
  $region45: #{self_attention_conv.2} parent=0
    _
  %s6 = ssub.s32 1, %s4
  %s7 = scalar_select 0, %s6, %s4
  loop: start=0, step=1, limit=4
  $region2: #{self_attention_conv.2} parent=0 // loop_pre_header
    _
  $region3: #{self_attention_conv.2} parent=0 // loop_header
    %s9 = sphi 0, %s13
    %p10 = scmp.ge.s32.totalorder %s9, 4
    %s19 = sphi 0, %s21
    %s22 = sphi 0, %s19
    %s23 = sphi 0, %s22
    %s39 = sphi 0, %s23
    %s43 = sphi 0, %s43
    %s45 = sphi 0, %s43
    %s46 = sphi 0, %s45
    %s60 = sphi 0, %s46
    %s64 = sphi 0, %s64
    %s66 = sphi 0, %s64
    %s67 = sphi 0, %s66
    %s81 = sphi 0, %s67
    %s87 = sphi 0, %s89
    %s90 = sphi 0, %s87
    %s91 = sphi 0, %s90
    %s107 = sphi 0, %s91
  $region4: #{self_attention_conv.2} parent=0 // loop_header_branch
    %12 = sbr.rel (%p10) target = $region8
  $region5: #{self_attention_conv.2} parent=0 // loop_body
    %s14 = ssub.s32 %s9, 1
    %s15 = ssub.s32 %s9, 2
    %s16 = sadd.s32 %s9, 1
    %s17 = ssub.s32 %s9, %s16
    %p18 = scmp.eq.s32.totalorder %s17, 0
    %s20 = sadd.s32 %s19, 1
    %s21 = scalar_select %p18, %s19, %s20
    %p24 = pneg %p18
    %p25 = scmp.eq.s32.totalorder %s9, 1
    %p26 = por %p24, %p25
    %p27 = scmp.ne.s32.totalorder %s19, %s22
    %p28 = scmp.eq.s32.totalorder %s9, 0
    %p29 = por %p27, %p28
    %p30 = scmp.ne.s32.totalorder %s19, %s22
    %p31 = scmp.eq.s32.totalorder %s14, 1
    %p32 = por %p30, %p31
    %p33 = scmp.ne.s32.totalorder %s22, %s23
    %p34 = scmp.eq.s32.totalorder %s14, 0
    %p35 = por %p33, %p34
    %p36 = scmp.ne.s32.totalorder %s22, %s23
    %p37 = scmp.eq.s32.totalorder %s15, 1
    %p38 = por %p36, %p37
    %p40 = scmp.ne.s32.totalorder %s23, %s39
    %p41 = scmp.eq.s32.totalorder %s15, 0
    %p42 = por %p40, %p41
    %s44 = sadd.s32 %s43, 1
    %p47 = scmp.eq.s32.totalorder %s9, 1
    %p48 = scmp.ne.s32.totalorder %s43, %s45
    %p49 = scmp.eq.s32.totalorder %s9, 0
    %p50 = por %p48, %p49
    %p51 = scmp.ne.s32.totalorder %s43, %s45
    %p52 = scmp.eq.s32.totalorder %s14, 1
    %p53 = por %p51, %p52
    %p54 = scmp.ne.s32.totalorder %s45, %s46
    %p55 = scmp.eq.s32.totalorder %s14, 0
    %p56 = por %p54, %p55
    %p57 = scmp.ne.s32.totalorder %s45, %s46
    %p58 = scmp.eq.s32.totalorder %s15, 1
    %p59 = por %p57, %p58
    %p61 = scmp.ne.s32.totalorder %s46, %s60
    %p62 = scmp.eq.s32.totalorder %s15, 0
    %p63 = por %p61, %p62
    %s65 = sadd.s32 %s64, 1
    %p68 = scmp.eq.s32.totalorder %s9, 1
    %p69 = scmp.ne.s32.totalorder %s64, %s66
    %p70 = scmp.eq.s32.totalorder %s9, 0
    %p71 = por %p69, %p70
    %p72 = scmp.ne.s32.totalorder %s64, %s66
    %p73 = scmp.eq.s32.totalorder %s14, 1
    %p74 = por %p72, %p73
    %p75 = scmp.ne.s32.totalorder %s66, %s67
    %p76 = scmp.eq.s32.totalorder %s14, 0
    %p77 = por %p75, %p76
    %p78 = scmp.ne.s32.totalorder %s66, %s67
    %p79 = scmp.eq.s32.totalorder %s15, 1
    %p80 = por %p78, %p79
    %p82 = scmp.ne.s32.totalorder %s67, %s81
    %p83 = scmp.eq.s32.totalorder %s15, 0
    %p84 = por %p82, %p83
    %s85 = ssub.s32 %s9, %s16
    %p86 = scmp.eq.s32.totalorder %s85, 0
    %s88 = sadd.s32 %s87, 1
    %s89 = scalar_select %p86, %s87, %s88
    %p92 = pneg %p86
    %p93 = scmp.eq.s32.totalorder %s9, 1
    %p94 = por %p92, %p93
    %p95 = scmp.ne.s32.totalorder %s87, %s90
    %p96 = scmp.eq.s32.totalorder %s9, 0
    %p97 = por %p95, %p96
    %p98 = scmp.ne.s32.totalorder %s87, %s90
    %p99 = scmp.eq.s32.totalorder %s14, 1
    %p100 = por %p98, %p99
    %p101 = scmp.ne.s32.totalorder %s90, %s91
    %p102 = scmp.eq.s32.totalorder %s14, 0
    %p103 = por %p101, %p102
    %p104 = scmp.ne.s32.totalorder %s90, %s91
    %p105 = scmp.eq.s32.totalorder %s15, 1
    %p106 = por %p104, %p105
    %p108 = scmp.ne.s32.totalorder %s91, %s107
    %p109 = scmp.eq.s32.totalorder %s15, 0
    %p110 = por %p108, %p109
    %p111 = scmp.le.s32.totalorder 1, %s9
    %p112 = scmp.lt.s32.totalorder %s9, 3
    %p113 = pnand %p111, %p112
    %p114 = pneg %p113
    // Predicated region
    $region9: #{self_attention_conv.2} parent=5 // pred_check
      _
    $region10: #{self_attention_conv.2} parent=5 // pred_check_branch
      %116 = sbr.rel (%p113) target = $region12
    $region11: #{self_attention_conv.2} parent=5 // pred_region
      %s117 = ssub.s32 %s9, 1
      // Predicated region
      $region13: #{self_attention_conv.2} parent=11 // pred_check
        %p118 = pneg %p56
      $region14: #{self_attention_conv.2} parent=11 // pred_check_branch
        %120 = sbr.rel (%p118) target = $region16
      $region15: #{self_attention_conv.2} parent=11 // pred_region
        _
      $region16: #{self_attention_conv.2} parent=11 // pred_fallthru
        _
      // Predicated region
      $region17: #{self_attention_conv.2} parent=11 // pred_check
        %p121 = pneg %p77
      $region18: #{self_attention_conv.2} parent=11 // pred_check_branch
        %123 = sbr.rel (%p121) target = $region20
      $region19: #{self_attention_conv.2} parent=11 // pred_region
        _
      $region20: #{self_attention_conv.2} parent=11 // pred_fallthru
        _
    $region12: #{self_attention_conv.2} parent=5 // pred_fallthru
      _
    %p124 = scmp.lt.s32.totalorder %s9, 2
    // Predicated region
    $region21: #{self_attention_conv.2} parent=5 // pred_check
      %p125 = pneg %p124
    $region22: #{self_attention_conv.2} parent=5 // pred_check_branch
      %127 = sbr.rel (%p125) target = $region24
    $region23: #{self_attention_conv.2} parent=5 // pred_region
      // Predicated region
      $region25: #{self_attention_conv.2} parent=23 // pred_check
        %p128 = pneg %p29
      $region26: #{self_attention_conv.2} parent=23 // pred_check_branch
        %130 = sbr.rel (%p128) target = $region28
      $region27: #{self_attention_conv.2} parent=23 // pred_region
        %p131 = scmp.lt.s32.totalorder %s9, 1
        %s132 = scalar_select %p131, %s9, 1
        %s133 = smul.addr %s132, 2
        %s134 = smul.addr %s133, 8
        %s135 = scalar_lea.vmem %s0, %s134
      $region28: #{self_attention_conv.2} parent=23 // pred_fallthru
        _
    $region24: #{self_attention_conv.2} parent=5 // pred_fallthru
      _
    %p136 = scmp.le.s32.totalorder 1, %s9
    %p137 = scmp.lt.s32.totalorder %s9, 3
    %p138 = pnand %p136, %p137
    %p139 = pneg %p138
    // Predicated region
    $region29: #{self_attention_conv.2} parent=5 // pred_check
      _
    $region30: #{self_attention_conv.2} parent=5 // pred_check_branch
      %141 = sbr.rel (%p138) target = $region32
    $region31: #{self_attention_conv.2} parent=5 // pred_region
      %s142 = ssub.s32 %s9, 1
      %p143 = scmp.lt.s32.totalorder %s14, 1
      %s144 = scalar_select %p143, %s14, 1
      %s145 = smul.addr %s144, 2
      %s146 = smul.addr %s145, 8
      %s147 = scalar_lea.vmem %s0, %s146
      %p148 = pneg %p35
      %p149 = pneg %p32
      %p150 = pneg %p56
      %p151 = pneg %p53
      %p152 = pneg %p77
      %p153 = pneg %p74
      %p154 = pneg %p103
      %p155 = pneg %p100
      %p156 = scmp.lt.s32.totalorder %s14, 1
      %s157 = scalar_select %p156, %s14, 1
      %s158 = smul.addr %s157, 8
      %s159 = scalar_lea.vmem %s3, %s158
      %p160 = scmp.lt.s32.totalorder %s14, 1
      %s161 = scalar_select %p160, %s14, 1
      %s162 = smul.addr %s161, 2
      %s163 = smul.addr %s162, 8
      %s164 = scalar_lea.vmem %s0, %s163
      %p165 = scmp.lt.s32.totalorder %s14, 1
      %s166 = scalar_select %p165, %s14, 1
      %s167 = smul.addr %s166, 8
      %s168 = scalar_lea.vmem %s3, %s167
      %v169 = vld [vmem:[%s164] sm:$0xff]
      %v170 = vld [vmem:[%s164 + $0x8] sm:$0x3]
      %v171 = vld [vmem:[%s1] sm:$0xf]
      %s172 = scalar_lea.vmem %s1, 4
      %v173 = vld [vmem:[%s172] sm:$0xf]
      %vm176 = vcmask 1046528
      %v177 = vrot.slane %v169, 1
      %v178 = vrot.slane %v170, 1
      %v179 = vsel %vm176, %v177, %v178
      %vm180 = vcmask 31744
      %v181 = vsel %vm180, %v179, 0
      %vm183 = vcmask 1043456
      %v185 = vsel %vm183, %v173, 0
      %187 = vmatpush.msra.mxu0 0.0
      %188 = vmatpush.msra.mxu0 0.0
      %189 = vmatpush.msra.mxu0 0.0
      %190 = vmatpush.msra.mxu0 0.0
      %191 = vmatpush.msra.mxu0 0.0
      %192 = vmatpush.msra.mxu0 0.0
      %193 = vmatpush.msra.mxu0 0.0
      %194 = vmatpush.msra.mxu0 0.0
      %195 = vmatpush.msra.mxu0 0.0
      %196 = vmatpush.msra.mxu0 0.0
      %197 = vmatpush.msra.mxu0 0.0
      %198 = vmatpush.msra.mxu0 0.0
      %199 = vmatpush.msra.mxu0 0.0
      %200 = vmatpush.msra.mxu0 0.0
      %201 = vmatpush.msra.mxu0 0.0
      %202 = vmatpush.msra.mxu0 %v185
      %203 = vmatmul.f32.gmra.mxu0 %v181
      %v204 = vpop.f32.mrf.mxu0
      %v205 = vadd.f32 0.0, %v204
      %206 = vdwg.mxu0
      %v207 = vsel %vm180, %v169, 0
      %v210 = vsel %vm183, %v171, 0
      %212 = vmatpush.msra.mxu0 0.0
      %213 = vmatpush.msra.mxu0 0.0
      %214 = vmatpush.msra.mxu0 0.0
      %215 = vmatpush.msra.mxu0 0.0
      %216 = vmatpush.msra.mxu0 0.0
      %217 = vmatpush.msra.mxu0 0.0
      %218 = vmatpush.msra.mxu0 0.0
      %219 = vmatpush.msra.mxu0 0.0
      %220 = vmatpush.msra.mxu0 0.0
      %221 = vmatpush.msra.mxu0 0.0
      %222 = vmatpush.msra.mxu0 0.0
      %223 = vmatpush.msra.mxu0 0.0
      %224 = vmatpush.msra.mxu0 0.0
      %225 = vmatpush.msra.mxu0 0.0
      %226 = vmatpush.msra.mxu0 0.0
      %227 = vmatpush.msra.mxu0 %v210
      %228 = vmatmul.f32.gmra.mxu0 %v207
      %v229 = vpop.f32.mrf.mxu0
      %v230 = vadd.f32 %v205, %v229
      %231 = vdwg.mxu0
      %s232 = scalar_lea.vmem %s1, 8
      %v233 = vld [vmem:[%s232] sm:$0xf]
      %vm234 = vcmask 1045504
      %v235 = vrot.slane %v169, 2
      %v236 = vrot.slane %v170, 2
      %v237 = vsel %vm234, %v235, %v236
      %v238 = vsel %vm180, %v237, 0
      %v241 = vsel %vm183, %v233, 0
      %243 = vmatpush.msra.mxu0 0.0
      %244 = vmatpush.msra.mxu0 0.0
      %245 = vmatpush.msra.mxu0 0.0
      %246 = vmatpush.msra.mxu0 0.0
      %247 = vmatpush.msra.mxu0 0.0
      %248 = vmatpush.msra.mxu0 0.0
      %249 = vmatpush.msra.mxu0 0.0
      %250 = vmatpush.msra.mxu0 0.0
      %251 = vmatpush.msra.mxu0 0.0
      %252 = vmatpush.msra.mxu0 0.0
      %253 = vmatpush.msra.mxu0 0.0
      %254 = vmatpush.msra.mxu0 0.0
      %255 = vmatpush.msra.mxu0 0.0
      %256 = vmatpush.msra.mxu0 0.0
      %257 = vmatpush.msra.mxu0 0.0
      %258 = vmatpush.msra.mxu0 %v241
      %259 = vmatmul.f32.gmra.mxu0 %v238
      %v260 = vpop.f32.mrf.mxu0
      %v261 = vadd.f32 0.0, %v260
      %262 = vdwg.mxu0
      %v263 = vadd.f32 %v230, %v261
      %v264 = vld [vmem:[%s2] sm:$0x1]
      %v266 = vperm.slane %v264, 0
      %v268 = vadd.f32 %v263, %v266
      %vm269 = vcmask 785408
      %270 = vst.msk [vmem:[%s168] sm:$0xff] %vm269, %v268
      %p271 = scmp.lt.s32.totalorder %s14, 1
      %s272 = scalar_select %p271, %s14, 1
      %s273 = smul.addr %s272, 8
      %s274 = scalar_lea.vmem %s3, %s273
      // Predicated region
      $region33: #{self_attention_conv.2} parent=31 // pred_check
        %p275 = pneg %p100
      $region34: #{self_attention_conv.2} parent=31 // pred_check_branch
        %277 = sbr.rel (%p275) target = $region36
      $region35: #{self_attention_conv.2} parent=31 // pred_region
        _
      $region36: #{self_attention_conv.2} parent=31 // pred_fallthru
        _
    $region32: #{self_attention_conv.2} parent=5 // pred_fallthru
      _
    %p278 = scmp.le.s32.totalorder 2, %s9
    // Predicated region
    $region37: #{self_attention_conv.2} parent=5 // pred_check
      %p279 = pneg %p278
    $region38: #{self_attention_conv.2} parent=5 // pred_check_branch
      %281 = sbr.rel (%p279) target = $region40
    $region39: #{self_attention_conv.2} parent=5 // pred_region
      %s282 = ssub.s32 %s9, 2
      // Predicated region
      $region41: #{self_attention_conv.2} parent=39 // pred_check
        %p283 = pneg %p106
      $region42: #{self_attention_conv.2} parent=39 // pred_check_branch
        %285 = sbr.rel (%p283) target = $region44
      $region43: #{self_attention_conv.2} parent=39 // pred_region
        %p286 = scmp.lt.s32.totalorder %s15, 1
        %s287 = scalar_select %p286, %s15, 1
        %s288 = smul.addr %s287, 8
        %s289 = scalar_lea.vmem %s3, %s288
      $region44: #{self_attention_conv.2} parent=39 // pred_fallthru
        _
    $region40: #{self_attention_conv.2} parent=5 // pred_fallthru
      _
  $region6: #{self_attention_conv.2} parent=0 // loop_footer
    %s13 = sadd.s32 1, %s9
  $region7: #{self_attention_conv.2} parent=0 // loop_footer_branch
    %8 = sbr.rel target = $region3
  $region8: #{self_attention_conv.2} parent=0 // loop_exit
    _

// kernel: self_attention_conv.3
$region0: #{self_attention_conv.3}
  #allocation0 [shape = 'u32[]', space=smem, size = 0x4, offset = 0x4, fixed_abs, tag = 'smem constant byte address 0x4 - core index']
  #allocation1 [shape = 'u32[72,128]{1,0:T(1,128)}', space=vmem, size = 0x9000, scoped, tag = 'internal scratch']
  %s0 = inlined_call_operand.vmem [shape: f32[16,8,12], index: 0, kind: input, shape index: {}]
  %s1 = inlined_call_operand.vmem [shape: f32[8,4,4], index: 1, kind: input, shape index: {}]
  %s2 = inlined_call_operand.vmem [shape: f32[1,4], index: 2, kind: input, shape index: {}]
  %s3 = inlined_call_operand.vmem [shape: f32[2,8,4], index: 3, kind: output, shape index: {}]
  %s4 = sld [smem:[#allocation0]]
  $region45: #{self_attention_conv.3} parent=0
    _
  %s6 = ssub.s32 1, %s4
  %s7 = scalar_select 0, %s6, %s4
  loop: start=0, step=1, limit=4
  $region2: #{self_attention_conv.3} parent=0 // loop_pre_header
    _
  $region3: #{self_attention_conv.3} parent=0 // loop_header
    %s9 = sphi 0, %s13
    %p10 = scmp.ge.s32.totalorder %s9, 4
    %s19 = sphi 0, %s21
    %s22 = sphi 0, %s19
    %s23 = sphi 0, %s22
    %s39 = sphi 0, %s23
    %s43 = sphi 0, %s43
    %s45 = sphi 0, %s43
    %s46 = sphi 0, %s45
    %s60 = sphi 0, %s46
    %s64 = sphi 0, %s64
    %s66 = sphi 0, %s64
    %s67 = sphi 0, %s66
    %s81 = sphi 0, %s67
    %s87 = sphi 0, %s89
    %s90 = sphi 0, %s87
    %s91 = sphi 0, %s90
    %s107 = sphi 0, %s91
  $region4: #{self_attention_conv.3} parent=0 // loop_header_branch
    %12 = sbr.rel (%p10) target = $region8
  $region5: #{self_attention_conv.3} parent=0 // loop_body
    %s14 = ssub.s32 %s9, 1
    %s15 = ssub.s32 %s9, 2
    %s16 = sadd.s32 %s9, 1
    %s17 = ssub.s32 %s9, %s16
    %p18 = scmp.eq.s32.totalorder %s17, 0
    %s20 = sadd.s32 %s19, 1
    %s21 = scalar_select %p18, %s19, %s20
    %p24 = pneg %p18
    %p25 = scmp.eq.s32.totalorder %s9, 1
    %p26 = por %p24, %p25
    %p27 = scmp.ne.s32.totalorder %s19, %s22
    %p28 = scmp.eq.s32.totalorder %s9, 0
    %p29 = por %p27, %p28
    %p30 = scmp.ne.s32.totalorder %s19, %s22
    %p31 = scmp.eq.s32.totalorder %s14, 1
    %p32 = por %p30, %p31
    %p33 = scmp.ne.s32.totalorder %s22, %s23
    %p34 = scmp.eq.s32.totalorder %s14, 0
    %p35 = por %p33, %p34
    %p36 = scmp.ne.s32.totalorder %s22, %s23
    %p37 = scmp.eq.s32.totalorder %s15, 1
    %p38 = por %p36, %p37
    %p40 = scmp.ne.s32.totalorder %s23, %s39
    %p41 = scmp.eq.s32.totalorder %s15, 0
    %p42 = por %p40, %p41
    %s44 = sadd.s32 %s43, 1
    %p47 = scmp.eq.s32.totalorder %s9, 1
    %p48 = scmp.ne.s32.totalorder %s43, %s45
    %p49 = scmp.eq.s32.totalorder %s9, 0
    %p50 = por %p48, %p49
    %p51 = scmp.ne.s32.totalorder %s43, %s45
    %p52 = scmp.eq.s32.totalorder %s14, 1
    %p53 = por %p51, %p52
    %p54 = scmp.ne.s32.totalorder %s45, %s46
    %p55 = scmp.eq.s32.totalorder %s14, 0
    %p56 = por %p54, %p55
    %p57 = scmp.ne.s32.totalorder %s45, %s46
    %p58 = scmp.eq.s32.totalorder %s15, 1
    %p59 = por %p57, %p58
    %p61 = scmp.ne.s32.totalorder %s46, %s60
    %p62 = scmp.eq.s32.totalorder %s15, 0
    %p63 = por %p61, %p62
    %s65 = sadd.s32 %s64, 1
    %p68 = scmp.eq.s32.totalorder %s9, 1
    %p69 = scmp.ne.s32.totalorder %s64, %s66
    %p70 = scmp.eq.s32.totalorder %s9, 0
    %p71 = por %p69, %p70
    %p72 = scmp.ne.s32.totalorder %s64, %s66
    %p73 = scmp.eq.s32.totalorder %s14, 1
    %p74 = por %p72, %p73
    %p75 = scmp.ne.s32.totalorder %s66, %s67
    %p76 = scmp.eq.s32.totalorder %s14, 0
    %p77 = por %p75, %p76
    %p78 = scmp.ne.s32.totalorder %s66, %s67
    %p79 = scmp.eq.s32.totalorder %s15, 1
    %p80 = por %p78, %p79
    %p82 = scmp.ne.s32.totalorder %s67, %s81
    %p83 = scmp.eq.s32.totalorder %s15, 0
    %p84 = por %p82, %p83
    %s85 = ssub.s32 %s9, %s16
    %p86 = scmp.eq.s32.totalorder %s85, 0
    %s88 = sadd.s32 %s87, 1
    %s89 = scalar_select %p86, %s87, %s88
    %p92 = pneg %p86
    %p93 = scmp.eq.s32.totalorder %s9, 1
    %p94 = por %p92, %p93
    %p95 = scmp.ne.s32.totalorder %s87, %s90
    %p96 = scmp.eq.s32.totalorder %s9, 0
    %p97 = por %p95, %p96
    %p98 = scmp.ne.s32.totalorder %s87, %s90
    %p99 = scmp.eq.s32.totalorder %s14, 1
    %p100 = por %p98, %p99
    %p101 = scmp.ne.s32.totalorder %s90, %s91
    %p102 = scmp.eq.s32.totalorder %s14, 0
    %p103 = por %p101, %p102
    %p104 = scmp.ne.s32.totalorder %s90, %s91
    %p105 = scmp.eq.s32.totalorder %s15, 1
    %p106 = por %p104, %p105
    %p108 = scmp.ne.s32.totalorder %s91, %s107
    %p109 = scmp.eq.s32.totalorder %s15, 0
    %p110 = por %p108, %p109
    %p111 = scmp.le.s32.totalorder 1, %s9
    %p112 = scmp.lt.s32.totalorder %s9, 3
    %p113 = pnand %p111, %p112
    %p114 = pneg %p113
    // Predicated region
    $region9: #{self_attention_conv.3} parent=5 // pred_check
      _
    $region10: #{self_attention_conv.3} parent=5 // pred_check_branch
      %116 = sbr.rel (%p113) target = $region12
    $region11: #{self_attention_conv.3} parent=5 // pred_region
      %s117 = ssub.s32 %s9, 1
      // Predicated region
      $region13: #{self_attention_conv.3} parent=11 // pred_check
        %p118 = pneg %p56
      $region14: #{self_attention_conv.3} parent=11 // pred_check_branch
        %120 = sbr.rel (%p118) target = $region16
      $region15: #{self_attention_conv.3} parent=11 // pred_region
        _
      $region16: #{self_attention_conv.3} parent=11 // pred_fallthru
        _
      // Predicated region
      $region17: #{self_attention_conv.3} parent=11 // pred_check
        %p121 = pneg %p77
      $region18: #{self_attention_conv.3} parent=11 // pred_check_branch
        %123 = sbr.rel (%p121) target = $region20
      $region19: #{self_attention_conv.3} parent=11 // pred_region
        _
      $region20: #{self_attention_conv.3} parent=11 // pred_fallthru
        _
    $region12: #{self_attention_conv.3} parent=5 // pred_fallthru
      _
    %p124 = scmp.lt.s32.totalorder %s9, 2
    // Predicated region
    $region21: #{self_attention_conv.3} parent=5 // pred_check
      %p125 = pneg %p124
    $region22: #{self_attention_conv.3} parent=5 // pred_check_branch
      %127 = sbr.rel (%p125) target = $region24
    $region23: #{self_attention_conv.3} parent=5 // pred_region
      // Predicated region
      $region25: #{self_attention_conv.3} parent=23 // pred_check
        %p128 = pneg %p29
      $region26: #{self_attention_conv.3} parent=23 // pred_check_branch
        %130 = sbr.rel (%p128) target = $region28
      $region27: #{self_attention_conv.3} parent=23 // pred_region
        %s131 = smul.u32 8, %s9
        %p132 = scmp.lt.s32.totalorder %s131, 15
        %s133 = scalar_select %p132, %s131, 15
        %s134 = smul.addr %s133, 8
        %s135 = scalar_lea.vmem %s0, %s134
        %s136 = smul.u32 8, %s9
      $region28: #{self_attention_conv.3} parent=23 // pred_fallthru
        _
    $region24: #{self_attention_conv.3} parent=5 // pred_fallthru
      _
    %p137 = scmp.le.s32.totalorder 1, %s9
    %p138 = scmp.lt.s32.totalorder %s9, 3
    %p139 = pnand %p137, %p138
    %p140 = pneg %p139
    // Predicated region
    $region29: #{self_attention_conv.3} parent=5 // pred_check
      _
    $region30: #{self_attention_conv.3} parent=5 // pred_check_branch
      %142 = sbr.rel (%p139) target = $region32
    $region31: #{self_attention_conv.3} parent=5 // pred_region
      %s143 = ssub.s32 %s9, 1
      %s144 = smul.u32 8, %s14
      %p145 = scmp.lt.s32.totalorder %s144, 15
      %s146 = scalar_select %p145, %s144, 15
      %s147 = smul.addr %s146, 8
      %s148 = scalar_lea.vmem %s0, %s147
      %p149 = pneg %p35
      %p150 = pneg %p32
      %p151 = pneg %p56
      %p152 = pneg %p53
      %p153 = pneg %p77
      %p154 = pneg %p74
      %p155 = pneg %p103
      %p156 = pneg %p100
      %p157 = scmp.lt.s32.totalorder %s14, 1
      %s158 = scalar_select %p157, %s14, 1
      %s159 = smul.addr %s158, 8
      %s160 = scalar_lea.vmem %s3, %s159
      %s161 = smul.u32 8, %s14
      %p162 = scmp.lt.s32.totalorder %s161, 15
      %s163 = scalar_select %p162, %s161, 15
      %s164 = smul.addr %s163, 8
      %s165 = scalar_lea.vmem %s0, %s164
      %s166 = smul.u32 8, %s14
      %p167 = scmp.lt.s32.totalorder %s14, 1
      %s168 = scalar_select %p167, %s14, 1
      %s169 = smul.addr %s168, 8
      %s170 = scalar_lea.vmem %s3, %s169
      %v171 = vlaneseq
      %v172 = vshrl.u32 %v171, 7
      %v173 = vlaneseq
      %v174 = vand.u32 %v173, 127
      %v175 = vadd.s32 %v172, 1
      %vm176 = vcmp.ge.s32.totalorder %v174, %v175
      %v177 = vld [vmem:[%s165] sm:$0xff]
      %179 = vrot.lane.b32.xlu0 %v177, 124
      %v180 = vpop.permute.xlu0 %179
      %vm181 = vcmask 31744
      %v182 = vsel %vm181, %v177, 0
      %v184 = vsel %vm181, %v180, 0
      %186 = vmatpush.xpose.msra.mxu0 0.0
      %187 = vmatpush.xpose.msra.mxu0 0.0
      %188 = vmatpush.xpose.msra.mxu0 0.0
      %189 = vmatpush.xpose.msra.mxu0 0.0
      %190 = vmatpush.xpose.msra.mxu0 0.0
      %191 = vmatpush.xpose.msra.mxu0 0.0
      %192 = vmatpush.xpose.msra.mxu0 0.0
      %193 = vmatpush.xpose.msra.mxu0 0.0
      %194 = vmatpush.xpose.msra.mxu0 0.0
      %195 = vmatpush.xpose.msra.mxu0 0.0
      %196 = vmatpush.xpose.msra.mxu0 0.0
      %197 = vmatpush.xpose.msra.mxu0 0.0
      %198 = vmatpush.xpose.msra.mxu0 0.0
      %199 = vmatpush.xpose.msra.mxu0 0.0
      %200 = vmatpush.xpose.msra.mxu0 0.0
      %201 = vmatpush.xpose.msra.mxu0 %v184
      %202 = vmatmul.f32.gmra.mxu0 %v182
      %v203 = vpop.f32.mrf.mxu0
      %v204 = vadd.f32 0.0, %v203
      %205 = vdwg.mxu0
      %v206 = vsel %vm176, -1e+30, %v204
      %vm207 = vcmask 64512
      %v208 = vsel %vm207, %v206, -inf
      %209 = vmax.xlane.f32.xlu0 %v208
      %v210 = vpop.xlane.xlu0 %209
      %v211 = vsub.f32 %v206, %v210
      %v212 = vmul.f32 %v211, 1.442695
      %v213 = vpow.pop %v212
      %v214 = vsel %vm207, %v213, 0.0
      %215 = vadd.xlane.f32.xlu0 %v214
      %v216 = vpop.xlane.xlu0 %215
      %v217 = vrcp.pop %v216
      %v218 = vmul.f32 %v216, %v217
      %v219 = vsub.f32 1.0, %v218
      %v220 = vmul.f32 %v217, %v219
      %v221 = vadd.f32 %v217, %v220
      %vm222 = vweird.f32 %v216
      %vm223 = vweird.f32 %v217
      %vm224 = vmor %vm222, %vm223
      %v225 = vsel %vm224, %v217, %v221
      %v226 = vand.u32 2147483647, %v216
      %vm227 = vcmp.eq.f32.partialorder %v226, 8.507059e+37
      %v228 = vand.u32 %v216, 2147483648
      %v229 = vor.u32 1.1754944e-38, %v228
      %v230 = vsel %vm227, %v229, %v225
      %v231 = vmul.f32 %v213, %v230
      %232 = vrot.lane.b32.xlu0 %v177, 120
      %v233 = vpop.permute.xlu0 %232
      %v236 = vsel %vm207, %v231, 0
      %238 = vmatpush.msra.mxu0 0.0
      %239 = vmatpush.msra.mxu0 0.0
      %240 = vmatpush.msra.mxu0 0.0
      %241 = vmatpush.msra.mxu0 0.0
      %242 = vmatpush.msra.mxu0 0.0
      %243 = vmatpush.msra.mxu0 0.0
      %244 = vmatpush.msra.mxu0 0.0
      %245 = vmatpush.msra.mxu0 0.0
      %246 = vmatpush.msra.mxu0 0.0
      %247 = vmatpush.msra.mxu0 0.0
      %248 = vmatpush.msra.mxu0 0.0
      %249 = vmatpush.msra.mxu0 0.0
      %250 = vmatpush.msra.mxu0 0.0
      %251 = vmatpush.msra.mxu0 0.0
      %252 = vmatpush.msra.mxu0 0.0
      %253 = vmatpush.msra.mxu0 %v233
      %254 = vmatmul.f32.gmra.mxu0 %v236
      %v255 = vpop.f32.mrf.mxu0
      %v256 = vadd.f32 0.0, %v255
      %257 = vdwg.mxu0
      %v258 = vld [vmem:[%s1] sm:$0xf]
      %s259 = scalar_lea.vmem %s165, 8
      %v260 = vld [vmem:[%s259] sm:$0xff]
      %262 = vrot.lane.b32.xlu0 %v260, 124
      %v263 = vpop.permute.xlu0 %262
      %v264 = vsel %vm181, %v260, 0
      %v266 = vsel %vm181, %v263, 0
      %268 = vmatpush.xpose.msra.mxu0 0.0
      %269 = vmatpush.xpose.msra.mxu0 0.0
      %270 = vmatpush.xpose.msra.mxu0 0.0
      %271 = vmatpush.xpose.msra.mxu0 0.0
      %272 = vmatpush.xpose.msra.mxu0 0.0
      %273 = vmatpush.xpose.msra.mxu0 0.0
      %274 = vmatpush.xpose.msra.mxu0 0.0
      %275 = vmatpush.xpose.msra.mxu0 0.0
      %276 = vmatpush.xpose.msra.mxu0 0.0
      %277 = vmatpush.xpose.msra.mxu0 0.0
      %278 = vmatpush.xpose.msra.mxu0 0.0
      %279 = vmatpush.xpose.msra.mxu0 0.0
      %280 = vmatpush.xpose.msra.mxu0 0.0
      %281 = vmatpush.xpose.msra.mxu0 0.0
      %282 = vmatpush.xpose.msra.mxu0 0.0
      %283 = vmatpush.xpose.msra.mxu0 %v266
      %284 = vmatmul.f32.gmra.mxu0 %v264
      %v285 = vpop.f32.mrf.mxu0
      %v286 = vadd.f32 0.0, %v285
      %287 = vdwg.mxu0
      %v288 = vsel %vm176, -1e+30, %v286
      %v289 = vsel %vm207, %v288, -inf
      %290 = vmax.xlane.f32.xlu0 %v289
      %v291 = vpop.xlane.xlu0 %290
      %v292 = vsub.f32 %v288, %v291
      %v293 = vmul.f32 %v292, 1.442695
      %v294 = vpow.pop %v293
      %v295 = vsel %vm207, %v294, 0.0
      %296 = vadd.xlane.f32.xlu0 %v295
      %v297 = vpop.xlane.xlu0 %296
      %v298 = vrcp.pop %v297
      %v299 = vmul.f32 %v297, %v298
      %v300 = vsub.f32 1.0, %v299
      %v301 = vmul.f32 %v298, %v300
      %v302 = vadd.f32 %v298, %v301
      %vm303 = vweird.f32 %v297
      %vm304 = vweird.f32 %v298
      %vm305 = vmor %vm303, %vm304
      %v306 = vsel %vm305, %v298, %v302
      %v307 = vand.u32 2147483647, %v297
      %vm308 = vcmp.eq.f32.partialorder %v307, 8.507059e+37
      %v309 = vand.u32 %v297, 2147483648
      %v310 = vor.u32 1.1754944e-38, %v309
      %v311 = vsel %vm308, %v310, %v306
      %v312 = vmul.f32 %v294, %v311
      %313 = vrot.lane.b32.xlu0 %v260, 120
      %v314 = vpop.permute.xlu0 %313
      %v317 = vsel %vm207, %v312, 0
      %319 = vmatpush.msra.mxu0 0.0
      %320 = vmatpush.msra.mxu0 0.0
      %321 = vmatpush.msra.mxu0 0.0
      %322 = vmatpush.msra.mxu0 0.0
      %323 = vmatpush.msra.mxu0 0.0
      %324 = vmatpush.msra.mxu0 0.0
      %325 = vmatpush.msra.mxu0 0.0
      %326 = vmatpush.msra.mxu0 0.0
      %327 = vmatpush.msra.mxu0 0.0
      %328 = vmatpush.msra.mxu0 0.0
      %329 = vmatpush.msra.mxu0 0.0
      %330 = vmatpush.msra.mxu0 0.0
      %331 = vmatpush.msra.mxu0 0.0
      %332 = vmatpush.msra.mxu0 0.0
      %333 = vmatpush.msra.mxu0 0.0
      %334 = vmatpush.msra.mxu0 %v314
      %335 = vmatmul.f32.gmra.mxu0 %v317
      %v336 = vpop.f32.mrf.mxu0
      %v337 = vadd.f32 0.0, %v336
      %338 = vdwg.mxu0
      %s339 = scalar_lea.vmem %s1, 4
      %v340 = vld [vmem:[%s339] sm:$0xf]
      %v342 = vsel %vm181, %v337, 0
      %vm344 = vcmask 1043456
      %v346 = vsel %vm344, %v340, 0
      %348 = vmatpush.msra.mxu0 0.0
      %349 = vmatpush.msra.mxu0 0.0
      %350 = vmatpush.msra.mxu0 0.0
      %351 = vmatpush.msra.mxu0 0.0
      %352 = vmatpush.msra.mxu0 0.0
      %353 = vmatpush.msra.mxu0 0.0
      %354 = vmatpush.msra.mxu0 0.0
      %355 = vmatpush.msra.mxu0 0.0
      %356 = vmatpush.msra.mxu0 0.0
      %357 = vmatpush.msra.mxu0 0.0
      %358 = vmatpush.msra.mxu0 0.0
      %359 = vmatpush.msra.mxu0 0.0
      %360 = vmatpush.msra.mxu0 0.0
      %361 = vmatpush.msra.mxu0 0.0
      %362 = vmatpush.msra.mxu0 0.0
      %363 = vmatpush.msra.mxu0 %v346
      %364 = vmatmul.f32.gmra.mxu0 %v342
      %v365 = vpop.f32.mrf.mxu0
      %v366 = vadd.f32 0.0, %v365
      %367 = vdwg.mxu0
      %v369 = vsel %vm181, %v256, 0
      %v372 = vsel %vm344, %v258, 0
      %374 = vmatpush.msra.mxu0 0.0
      %375 = vmatpush.msra.mxu0 0.0
      %376 = vmatpush.msra.mxu0 0.0
      %377 = vmatpush.msra.mxu0 0.0
      %378 = vmatpush.msra.mxu0 0.0
      %379 = vmatpush.msra.mxu0 0.0
      %380 = vmatpush.msra.mxu0 0.0
      %381 = vmatpush.msra.mxu0 0.0
      %382 = vmatpush.msra.mxu0 0.0
      %383 = vmatpush.msra.mxu0 0.0
      %384 = vmatpush.msra.mxu0 0.0
      %385 = vmatpush.msra.mxu0 0.0
      %386 = vmatpush.msra.mxu0 0.0
      %387 = vmatpush.msra.mxu0 0.0
      %388 = vmatpush.msra.mxu0 0.0
      %389 = vmatpush.msra.mxu0 %v372
      %390 = vmatmul.f32.gmra.mxu0 %v369
      %v391 = vpop.f32.mrf.mxu0
      %v392 = vadd.f32 %v366, %v391
      %393 = vdwg.mxu0
      %s394 = scalar_lea.vmem %s165, 16
      %v395 = vld [vmem:[%s394] sm:$0xff]
      %397 = vrot.lane.b32.xlu0 %v395, 124
      %v398 = vpop.permute.xlu0 %397
      %v399 = vsel %vm181, %v395, 0
      %v401 = vsel %vm181, %v398, 0
      %403 = vmatpush.xpose.msra.mxu0 0.0
      %404 = vmatpush.xpose.msra.mxu0 0.0
      %405 = vmatpush.xpose.msra.mxu0 0.0
      %406 = vmatpush.xpose.msra.mxu0 0.0
      %407 = vmatpush.xpose.msra.mxu0 0.0
      %408 = vmatpush.xpose.msra.mxu0 0.0
      %409 = vmatpush.xpose.msra.mxu0 0.0
      %410 = vmatpush.xpose.msra.mxu0 0.0
      %411 = vmatpush.xpose.msra.mxu0 0.0
      %412 = vmatpush.xpose.msra.mxu0 0.0
      %413 = vmatpush.xpose.msra.mxu0 0.0
      %414 = vmatpush.xpose.msra.mxu0 0.0
      %415 = vmatpush.xpose.msra.mxu0 0.0
      %416 = vmatpush.xpose.msra.mxu0 0.0
      %417 = vmatpush.xpose.msra.mxu0 0.0
      %418 = vmatpush.xpose.msra.mxu0 %v401
      %419 = vmatmul.f32.gmra.mxu0 %v399
      %v420 = vpop.f32.mrf.mxu0
      %v421 = vadd.f32 0.0, %v420
      %422 = vdwg.mxu0
      %v423 = vsel %vm176, -1e+30, %v421
      %v424 = vsel %vm207, %v423, -inf
      %425 = vmax.xlane.f32.xlu0 %v424
      %v426 = vpop.xlane.xlu0 %425
      %v427 = vsub.f32 %v423, %v426
      %v428 = vmul.f32 %v427, 1.442695
      %v429 = vpow.pop %v428
      %v430 = vsel %vm207, %v429, 0.0
      %431 = vadd.xlane.f32.xlu0 %v430
      %v432 = vpop.xlane.xlu0 %431
      %v433 = vrcp.pop %v432
      %v434 = vmul.f32 %v432, %v433
      %v435 = vsub.f32 1.0, %v434
      %v436 = vmul.f32 %v433, %v435
      %v437 = vadd.f32 %v433, %v436
      %vm438 = vweird.f32 %v432
      %vm439 = vweird.f32 %v433
      %vm440 = vmor %vm438, %vm439
      %v441 = vsel %vm440, %v433, %v437
      %v442 = vand.u32 2147483647, %v432
      %vm443 = vcmp.eq.f32.partialorder %v442, 8.507059e+37
      %v444 = vand.u32 %v432, 2147483648
      %v445 = vor.u32 1.1754944e-38, %v444
      %v446 = vsel %vm443, %v445, %v441
      %v447 = vmul.f32 %v429, %v446
      %448 = vrot.lane.b32.xlu0 %v395, 120
      %v449 = vpop.permute.xlu0 %448
      %v452 = vsel %vm207, %v447, 0
      %454 = vmatpush.msra.mxu0 0.0
      %455 = vmatpush.msra.mxu0 0.0
      %456 = vmatpush.msra.mxu0 0.0
      %457 = vmatpush.msra.mxu0 0.0
      %458 = vmatpush.msra.mxu0 0.0
      %459 = vmatpush.msra.mxu0 0.0
      %460 = vmatpush.msra.mxu0 0.0
      %461 = vmatpush.msra.mxu0 0.0
      %462 = vmatpush.msra.mxu0 0.0
      %463 = vmatpush.msra.mxu0 0.0
      %464 = vmatpush.msra.mxu0 0.0
      %465 = vmatpush.msra.mxu0 0.0
      %466 = vmatpush.msra.mxu0 0.0
      %467 = vmatpush.msra.mxu0 0.0
      %468 = vmatpush.msra.mxu0 0.0
      %469 = vmatpush.msra.mxu0 %v449
      %470 = vmatmul.f32.gmra.mxu0 %v452
      %v471 = vpop.f32.mrf.mxu0
      %v472 = vadd.f32 0.0, %v471
      %473 = vdwg.mxu0
      %s474 = scalar_lea.vmem %s1, 8
      %v475 = vld [vmem:[%s474] sm:$0xf]
      %v477 = vsel %vm181, %v472, 0
      %v480 = vsel %vm344, %v475, 0
      %482 = vmatpush.msra.mxu0 0.0
      %483 = vmatpush.msra.mxu0 0.0
      %484 = vmatpush.msra.mxu0 0.0
      %485 = vmatpush.msra.mxu0 0.0
      %486 = vmatpush.msra.mxu0 0.0
      %487 = vmatpush.msra.mxu0 0.0
      %488 = vmatpush.msra.mxu0 0.0
      %489 = vmatpush.msra.mxu0 0.0
      %490 = vmatpush.msra.mxu0 0.0
      %491 = vmatpush.msra.mxu0 0.0
      %492 = vmatpush.msra.mxu0 0.0
      %493 = vmatpush.msra.mxu0 0.0
      %494 = vmatpush.msra.mxu0 0.0
      %495 = vmatpush.msra.mxu0 0.0
      %496 = vmatpush.msra.mxu0 0.0
      %497 = vmatpush.msra.mxu0 %v480
      %498 = vmatmul.f32.gmra.mxu0 %v477
      %v499 = vpop.f32.mrf.mxu0
      %v500 = vadd.f32 0.0, %v499
      %501 = vdwg.mxu0
      %v502 = vadd.f32 %v392, %v500
      %s503 = scalar_lea.vmem %s165, 24
      %v504 = vld [vmem:[%s503] sm:$0xff]
      %506 = vrot.lane.b32.xlu0 %v504, 124
      %v507 = vpop.permute.xlu0 %506
      %v508 = vsel %vm181, %v504, 0
      %v510 = vsel %vm181, %v507, 0
      %512 = vmatpush.xpose.msra.mxu0 0.0
      %513 = vmatpush.xpose.msra.mxu0 0.0
      %514 = vmatpush.xpose.msra.mxu0 0.0
      %515 = vmatpush.xpose.msra.mxu0 0.0
      %516 = vmatpush.xpose.msra.mxu0 0.0
      %517 = vmatpush.xpose.msra.mxu0 0.0
      %518 = vmatpush.xpose.msra.mxu0 0.0
      %519 = vmatpush.xpose.msra.mxu0 0.0
      %520 = vmatpush.xpose.msra.mxu0 0.0
      %521 = vmatpush.xpose.msra.mxu0 0.0
      %522 = vmatpush.xpose.msra.mxu0 0.0
      %523 = vmatpush.xpose.msra.mxu0 0.0
      %524 = vmatpush.xpose.msra.mxu0 0.0
      %525 = vmatpush.xpose.msra.mxu0 0.0
      %526 = vmatpush.xpose.msra.mxu0 0.0
      %527 = vmatpush.xpose.msra.mxu0 %v510
      %528 = vmatmul.f32.gmra.mxu0 %v508
      %v529 = vpop.f32.mrf.mxu0
      %v530 = vadd.f32 0.0, %v529
      %531 = vdwg.mxu0
      %v532 = vsel %vm176, -1e+30, %v530
      %v533 = vsel %vm207, %v532, -inf
      %534 = vmax.xlane.f32.xlu0 %v533
      %v535 = vpop.xlane.xlu0 %534
      %v536 = vsub.f32 %v532, %v535
      %v537 = vmul.f32 %v536, 1.442695
      %v538 = vpow.pop %v537
      %v539 = vsel %vm207, %v538, 0.0
      %540 = vadd.xlane.f32.xlu0 %v539
      %v541 = vpop.xlane.xlu0 %540
      %v542 = vrcp.pop %v541
      %v543 = vmul.f32 %v541, %v542
      %v544 = vsub.f32 1.0, %v543
      %v545 = vmul.f32 %v542, %v544
      %v546 = vadd.f32 %v542, %v545
      %vm547 = vweird.f32 %v541
      %vm548 = vweird.f32 %v542
      %vm549 = vmor %vm547, %vm548
      %v550 = vsel %vm549, %v542, %v546
      %v551 = vand.u32 2147483647, %v541
      %vm552 = vcmp.eq.f32.partialorder %v551, 8.507059e+37
      %v553 = vand.u32 %v541, 2147483648
      %v554 = vor.u32 1.1754944e-38, %v553
      %v555 = vsel %vm552, %v554, %v550
      %v556 = vmul.f32 %v538, %v555
      %557 = vrot.lane.b32.xlu0 %v504, 120
      %v558 = vpop.permute.xlu0 %557
      %v561 = vsel %vm207, %v556, 0
      %563 = vmatpush.msra.mxu0 0.0
      %564 = vmatpush.msra.mxu0 0.0
      %565 = vmatpush.msra.mxu0 0.0
      %566 = vmatpush.msra.mxu0 0.0
      %567 = vmatpush.msra.mxu0 0.0
      %568 = vmatpush.msra.mxu0 0.0
      %569 = vmatpush.msra.mxu0 0.0
      %570 = vmatpush.msra.mxu0 0.0
      %571 = vmatpush.msra.mxu0 0.0
      %572 = vmatpush.msra.mxu0 0.0
      %573 = vmatpush.msra.mxu0 0.0
      %574 = vmatpush.msra.mxu0 0.0
      %575 = vmatpush.msra.mxu0 0.0
      %576 = vmatpush.msra.mxu0 0.0
      %577 = vmatpush.msra.mxu0 0.0
      %578 = vmatpush.msra.mxu0 %v558
      %579 = vmatmul.f32.gmra.mxu0 %v561
      %v580 = vpop.f32.mrf.mxu0
      %v581 = vadd.f32 0.0, %v580
      %582 = vdwg.mxu0
      %s583 = scalar_lea.vmem %s1, 12
      %v584 = vld [vmem:[%s583] sm:$0xf]
      %v586 = vsel %vm181, %v581, 0
      %v589 = vsel %vm344, %v584, 0
      %591 = vmatpush.msra.mxu0 0.0
      %592 = vmatpush.msra.mxu0 0.0
      %593 = vmatpush.msra.mxu0 0.0
      %594 = vmatpush.msra.mxu0 0.0
      %595 = vmatpush.msra.mxu0 0.0
      %596 = vmatpush.msra.mxu0 0.0
      %597 = vmatpush.msra.mxu0 0.0
      %598 = vmatpush.msra.mxu0 0.0
      %599 = vmatpush.msra.mxu0 0.0
      %600 = vmatpush.msra.mxu0 0.0
      %601 = vmatpush.msra.mxu0 0.0
      %602 = vmatpush.msra.mxu0 0.0
      %603 = vmatpush.msra.mxu0 0.0
      %604 = vmatpush.msra.mxu0 0.0
      %605 = vmatpush.msra.mxu0 0.0
      %606 = vmatpush.msra.mxu0 %v589
      %607 = vmatmul.f32.gmra.mxu0 %v586
      %v608 = vpop.f32.mrf.mxu0
      %v609 = vadd.f32 0.0, %v608
      %610 = vdwg.mxu0
      %v611 = vadd.f32 %v502, %v609
      %s612 = scalar_lea.vmem %s165, 32
      %v613 = vld [vmem:[%s612] sm:$0xff]
      %615 = vrot.lane.b32.xlu0 %v613, 124
      %v616 = vpop.permute.xlu0 %615
      %v617 = vsel %vm181, %v613, 0
      %v619 = vsel %vm181, %v616, 0
      %621 = vmatpush.xpose.msra.mxu0 0.0
      %622 = vmatpush.xpose.msra.mxu0 0.0
      %623 = vmatpush.xpose.msra.mxu0 0.0
      %624 = vmatpush.xpose.msra.mxu0 0.0
      %625 = vmatpush.xpose.msra.mxu0 0.0
      %626 = vmatpush.xpose.msra.mxu0 0.0
      %627 = vmatpush.xpose.msra.mxu0 0.0
      %628 = vmatpush.xpose.msra.mxu0 0.0
      %629 = vmatpush.xpose.msra.mxu0 0.0
      %630 = vmatpush.xpose.msra.mxu0 0.0
      %631 = vmatpush.xpose.msra.mxu0 0.0
      %632 = vmatpush.xpose.msra.mxu0 0.0
      %633 = vmatpush.xpose.msra.mxu0 0.0
      %634 = vmatpush.xpose.msra.mxu0 0.0
      %635 = vmatpush.xpose.msra.mxu0 0.0
      %636 = vmatpush.xpose.msra.mxu0 %v619
      %637 = vmatmul.f32.gmra.mxu0 %v617
      %v638 = vpop.f32.mrf.mxu0
      %v639 = vadd.f32 0.0, %v638
      %640 = vdwg.mxu0
      %v641 = vsel %vm176, -1e+30, %v639
      %v642 = vsel %vm207, %v641, -inf
      %643 = vmax.xlane.f32.xlu0 %v642
      %v644 = vpop.xlane.xlu0 %643
      %v645 = vsub.f32 %v641, %v644
      %v646 = vmul.f32 %v645, 1.442695
      %v647 = vpow.pop %v646
      %v648 = vsel %vm207, %v647, 0.0
      %649 = vadd.xlane.f32.xlu0 %v648
      %v650 = vpop.xlane.xlu0 %649
      %v651 = vrcp.pop %v650
      %v652 = vmul.f32 %v650, %v651
      %v653 = vsub.f32 1.0, %v652
      %v654 = vmul.f32 %v651, %v653
      %v655 = vadd.f32 %v651, %v654
      %vm656 = vweird.f32 %v650
      %vm657 = vweird.f32 %v651
      %vm658 = vmor %vm656, %vm657
      %v659 = vsel %vm658, %v651, %v655
      %v660 = vand.u32 2147483647, %v650
      %vm661 = vcmp.eq.f32.partialorder %v660, 8.507059e+37
      %v662 = vand.u32 %v650, 2147483648
      %v663 = vor.u32 1.1754944e-38, %v662
      %v664 = vsel %vm661, %v663, %v659
      %v665 = vmul.f32 %v647, %v664
      %666 = vrot.lane.b32.xlu0 %v613, 120
      %v667 = vpop.permute.xlu0 %666
      %v670 = vsel %vm207, %v665, 0
      %672 = vmatpush.msra.mxu0 0.0
      %673 = vmatpush.msra.mxu0 0.0
      %674 = vmatpush.msra.mxu0 0.0
      %675 = vmatpush.msra.mxu0 0.0
      %676 = vmatpush.msra.mxu0 0.0
      %677 = vmatpush.msra.mxu0 0.0
      %678 = vmatpush.msra.mxu0 0.0
      %679 = vmatpush.msra.mxu0 0.0
      %680 = vmatpush.msra.mxu0 0.0
      %681 = vmatpush.msra.mxu0 0.0
      %682 = vmatpush.msra.mxu0 0.0
      %683 = vmatpush.msra.mxu0 0.0
      %684 = vmatpush.msra.mxu0 0.0
      %685 = vmatpush.msra.mxu0 0.0
      %686 = vmatpush.msra.mxu0 0.0
      %687 = vmatpush.msra.mxu0 %v667
      %688 = vmatmul.f32.gmra.mxu0 %v670
      %v689 = vpop.f32.mrf.mxu0
      %v690 = vadd.f32 0.0, %v689
      %691 = vdwg.mxu0
      %s692 = scalar_lea.vmem %s1, 16
      %v693 = vld [vmem:[%s692] sm:$0xf]
      %v695 = vsel %vm181, %v690, 0
      %v698 = vsel %vm344, %v693, 0
      %700 = vmatpush.msra.mxu0 0.0
      %701 = vmatpush.msra.mxu0 0.0
      %702 = vmatpush.msra.mxu0 0.0
      %703 = vmatpush.msra.mxu0 0.0
      %704 = vmatpush.msra.mxu0 0.0
      %705 = vmatpush.msra.mxu0 0.0
      %706 = vmatpush.msra.mxu0 0.0
      %707 = vmatpush.msra.mxu0 0.0
      %708 = vmatpush.msra.mxu0 0.0
      %709 = vmatpush.msra.mxu0 0.0
      %710 = vmatpush.msra.mxu0 0.0
      %711 = vmatpush.msra.mxu0 0.0
      %712 = vmatpush.msra.mxu0 0.0
      %713 = vmatpush.msra.mxu0 0.0
      %714 = vmatpush.msra.mxu0 0.0
      %715 = vmatpush.msra.mxu0 %v698
      %716 = vmatmul.f32.gmra.mxu0 %v695
      %v717 = vpop.f32.mrf.mxu0
      %v718 = vadd.f32 0.0, %v717
      %719 = vdwg.mxu0
      %v720 = vadd.f32 %v611, %v718
      %s721 = scalar_lea.vmem %s165, 40
      %v722 = vld [vmem:[%s721] sm:$0xff]
      %724 = vrot.lane.b32.xlu0 %v722, 124
      %v725 = vpop.permute.xlu0 %724
      %v726 = vsel %vm181, %v722, 0
      %v728 = vsel %vm181, %v725, 0
      %730 = vmatpush.xpose.msra.mxu0 0.0
      %731 = vmatpush.xpose.msra.mxu0 0.0
      %732 = vmatpush.xpose.msra.mxu0 0.0
      %733 = vmatpush.xpose.msra.mxu0 0.0
      %734 = vmatpush.xpose.msra.mxu0 0.0
      %735 = vmatpush.xpose.msra.mxu0 0.0
      %736 = vmatpush.xpose.msra.mxu0 0.0
      %737 = vmatpush.xpose.msra.mxu0 0.0
      %738 = vmatpush.xpose.msra.mxu0 0.0
      %739 = vmatpush.xpose.msra.mxu0 0.0
      %740 = vmatpush.xpose.msra.mxu0 0.0
      %741 = vmatpush.xpose.msra.mxu0 0.0
      %742 = vmatpush.xpose.msra.mxu0 0.0
      %743 = vmatpush.xpose.msra.mxu0 0.0
      %744 = vmatpush.xpose.msra.mxu0 0.0
      %745 = vmatpush.xpose.msra.mxu0 %v728
      %746 = vmatmul.f32.gmra.mxu0 %v726
      %v747 = vpop.f32.mrf.mxu0
      %v748 = vadd.f32 0.0, %v747
      %749 = vdwg.mxu0
      %v750 = vsel %vm176, -1e+30, %v748
      %v751 = vsel %vm207, %v750, -inf
      %752 = vmax.xlane.f32.xlu0 %v751
      %v753 = vpop.xlane.xlu0 %752
      %v754 = vsub.f32 %v750, %v753
      %v755 = vmul.f32 %v754, 1.442695
      %v756 = vpow.pop %v755
      %v757 = vsel %vm207, %v756, 0.0
      %758 = vadd.xlane.f32.xlu0 %v757
      %v759 = vpop.xlane.xlu0 %758
      %v760 = vrcp.pop %v759
      %v761 = vmul.f32 %v759, %v760
      %v762 = vsub.f32 1.0, %v761
      %v763 = vmul.f32 %v760, %v762
      %v764 = vadd.f32 %v760, %v763
      %vm765 = vweird.f32 %v759
      %vm766 = vweird.f32 %v760
      %vm767 = vmor %vm765, %vm766
      %v768 = vsel %vm767, %v760, %v764
      %v769 = vand.u32 2147483647, %v759
      %vm770 = vcmp.eq.f32.partialorder %v769, 8.507059e+37
      %v771 = vand.u32 %v759, 2147483648
      %v772 = vor.u32 1.1754944e-38, %v771
      %v773 = vsel %vm770, %v772, %v768
      %v774 = vmul.f32 %v756, %v773
      %775 = vrot.lane.b32.xlu0 %v722, 120
      %v776 = vpop.permute.xlu0 %775
      %v779 = vsel %vm207, %v774, 0
      %781 = vmatpush.msra.mxu0 0.0
      %782 = vmatpush.msra.mxu0 0.0
      %783 = vmatpush.msra.mxu0 0.0
      %784 = vmatpush.msra.mxu0 0.0
      %785 = vmatpush.msra.mxu0 0.0
      %786 = vmatpush.msra.mxu0 0.0
      %787 = vmatpush.msra.mxu0 0.0
      %788 = vmatpush.msra.mxu0 0.0
      %789 = vmatpush.msra.mxu0 0.0
      %790 = vmatpush.msra.mxu0 0.0
      %791 = vmatpush.msra.mxu0 0.0
      %792 = vmatpush.msra.mxu0 0.0
      %793 = vmatpush.msra.mxu0 0.0
      %794 = vmatpush.msra.mxu0 0.0
      %795 = vmatpush.msra.mxu0 0.0
      %796 = vmatpush.msra.mxu0 %v776
      %797 = vmatmul.f32.gmra.mxu0 %v779
      %v798 = vpop.f32.mrf.mxu0
      %v799 = vadd.f32 0.0, %v798
      %800 = vdwg.mxu0
      %s801 = scalar_lea.vmem %s1, 20
      %v802 = vld [vmem:[%s801] sm:$0xf]
      %v804 = vsel %vm181, %v799, 0
      %v807 = vsel %vm344, %v802, 0
      %809 = vmatpush.msra.mxu0 0.0
      %810 = vmatpush.msra.mxu0 0.0
      %811 = vmatpush.msra.mxu0 0.0
      %812 = vmatpush.msra.mxu0 0.0
      %813 = vmatpush.msra.mxu0 0.0
      %814 = vmatpush.msra.mxu0 0.0
      %815 = vmatpush.msra.mxu0 0.0
      %816 = vmatpush.msra.mxu0 0.0
      %817 = vmatpush.msra.mxu0 0.0
      %818 = vmatpush.msra.mxu0 0.0
      %819 = vmatpush.msra.mxu0 0.0
      %820 = vmatpush.msra.mxu0 0.0
      %821 = vmatpush.msra.mxu0 0.0
      %822 = vmatpush.msra.mxu0 0.0
      %823 = vmatpush.msra.mxu0 0.0
      %824 = vmatpush.msra.mxu0 %v807
      %825 = vmatmul.f32.gmra.mxu0 %v804
      %v826 = vpop.f32.mrf.mxu0
      %v827 = vadd.f32 0.0, %v826
      %828 = vdwg.mxu0
      %v829 = vadd.f32 %v720, %v827
      %s830 = scalar_lea.vmem %s165, 48
      %v831 = vld [vmem:[%s830] sm:$0xff]
      %833 = vrot.lane.b32.xlu0 %v831, 124
      %v834 = vpop.permute.xlu0 %833
      %v835 = vsel %vm181, %v831, 0
      %v837 = vsel %vm181, %v834, 0
      %839 = vmatpush.xpose.msra.mxu0 0.0
      %840 = vmatpush.xpose.msra.mxu0 0.0
      %841 = vmatpush.xpose.msra.mxu0 0.0
      %842 = vmatpush.xpose.msra.mxu0 0.0
      %843 = vmatpush.xpose.msra.mxu0 0.0
      %844 = vmatpush.xpose.msra.mxu0 0.0
      %845 = vmatpush.xpose.msra.mxu0 0.0
      %846 = vmatpush.xpose.msra.mxu0 0.0
      %847 = vmatpush.xpose.msra.mxu0 0.0
      %848 = vmatpush.xpose.msra.mxu0 0.0
      %849 = vmatpush.xpose.msra.mxu0 0.0
      %850 = vmatpush.xpose.msra.mxu0 0.0
      %851 = vmatpush.xpose.msra.mxu0 0.0
      %852 = vmatpush.xpose.msra.mxu0 0.0
      %853 = vmatpush.xpose.msra.mxu0 0.0
      %854 = vmatpush.xpose.msra.mxu0 %v837
      %855 = vmatmul.f32.gmra.mxu0 %v835
      %v856 = vpop.f32.mrf.mxu0
      %v857 = vadd.f32 0.0, %v856
      %858 = vdwg.mxu0
      %v859 = vsel %vm176, -1e+30, %v857
      %v860 = vsel %vm207, %v859, -inf
      %861 = vmax.xlane.f32.xlu0 %v860
      %v862 = vpop.xlane.xlu0 %861
      %v863 = vsub.f32 %v859, %v862
      %v864 = vmul.f32 %v863, 1.442695
      %v865 = vpow.pop %v864
      %v866 = vsel %vm207, %v865, 0.0
      %867 = vadd.xlane.f32.xlu0 %v866
      %v868 = vpop.xlane.xlu0 %867
      %v869 = vrcp.pop %v868
      %v870 = vmul.f32 %v868, %v869
      %v871 = vsub.f32 1.0, %v870
      %v872 = vmul.f32 %v869, %v871
      %v873 = vadd.f32 %v869, %v872
      %vm874 = vweird.f32 %v868
      %vm875 = vweird.f32 %v869
      %vm876 = vmor %vm874, %vm875
      %v877 = vsel %vm876, %v869, %v873
      %v878 = vand.u32 2147483647, %v868
      %vm879 = vcmp.eq.f32.partialorder %v878, 8.507059e+37
      %v880 = vand.u32 %v868, 2147483648
      %v881 = vor.u32 1.1754944e-38, %v880
      %v882 = vsel %vm879, %v881, %v877
      %v883 = vmul.f32 %v865, %v882
      %884 = vrot.lane.b32.xlu0 %v831, 120
      %v885 = vpop.permute.xlu0 %884
      %v888 = vsel %vm207, %v883, 0
      %890 = vmatpush.msra.mxu0 0.0
      %891 = vmatpush.msra.mxu0 0.0
      %892 = vmatpush.msra.mxu0 0.0
      %893 = vmatpush.msra.mxu0 0.0
      %894 = vmatpush.msra.mxu0 0.0
      %895 = vmatpush.msra.mxu0 0.0
      %896 = vmatpush.msra.mxu0 0.0
      %897 = vmatpush.msra.mxu0 0.0
      %898 = vmatpush.msra.mxu0 0.0
      %899 = vmatpush.msra.mxu0 0.0
      %900 = vmatpush.msra.mxu0 0.0
      %901 = vmatpush.msra.mxu0 0.0
      %902 = vmatpush.msra.mxu0 0.0
      %903 = vmatpush.msra.mxu0 0.0
      %904 = vmatpush.msra.mxu0 0.0
      %905 = vmatpush.msra.mxu0 %v885
      %906 = vmatmul.f32.gmra.mxu0 %v888
      %v907 = vpop.f32.mrf.mxu0
      %v908 = vadd.f32 0.0, %v907
      %909 = vdwg.mxu0
      %s910 = scalar_lea.vmem %s1, 24
      %v911 = vld [vmem:[%s910] sm:$0xf]
      %v913 = vsel %vm181, %v908, 0
      %v916 = vsel %vm344, %v911, 0
      %918 = vmatpush.msra.mxu0 0.0
      %919 = vmatpush.msra.mxu0 0.0
      %920 = vmatpush.msra.mxu0 0.0
      %921 = vmatpush.msra.mxu0 0.0
      %922 = vmatpush.msra.mxu0 0.0
      %923 = vmatpush.msra.mxu0 0.0
      %924 = vmatpush.msra.mxu0 0.0
      %925 = vmatpush.msra.mxu0 0.0
      %926 = vmatpush.msra.mxu0 0.0
      %927 = vmatpush.msra.mxu0 0.0
      %928 = vmatpush.msra.mxu0 0.0
      %929 = vmatpush.msra.mxu0 0.0
      %930 = vmatpush.msra.mxu0 0.0
      %931 = vmatpush.msra.mxu0 0.0
      %932 = vmatpush.msra.mxu0 0.0
      %933 = vmatpush.msra.mxu0 %v916
      %934 = vmatmul.f32.gmra.mxu0 %v913
      %v935 = vpop.f32.mrf.mxu0
      %v936 = vadd.f32 0.0, %v935
      %937 = vdwg.mxu0
      %v938 = vadd.f32 %v829, %v936
      %s939 = scalar_lea.vmem %s165, 56
      %v940 = vld [vmem:[%s939] sm:$0xff]
      %942 = vrot.lane.b32.xlu0 %v940, 124
      %v943 = vpop.permute.xlu0 %942
      %v944 = vsel %vm181, %v940, 0
      %v946 = vsel %vm181, %v943, 0
      %948 = vmatpush.xpose.msra.mxu0 0.0
      %949 = vmatpush.xpose.msra.mxu0 0.0
      %950 = vmatpush.xpose.msra.mxu0 0.0
      %951 = vmatpush.xpose.msra.mxu0 0.0
      %952 = vmatpush.xpose.msra.mxu0 0.0
      %953 = vmatpush.xpose.msra.mxu0 0.0
      %954 = vmatpush.xpose.msra.mxu0 0.0
      %955 = vmatpush.xpose.msra.mxu0 0.0
      %956 = vmatpush.xpose.msra.mxu0 0.0
      %957 = vmatpush.xpose.msra.mxu0 0.0
      %958 = vmatpush.xpose.msra.mxu0 0.0
      %959 = vmatpush.xpose.msra.mxu0 0.0
      %960 = vmatpush.xpose.msra.mxu0 0.0
      %961 = vmatpush.xpose.msra.mxu0 0.0
      %962 = vmatpush.xpose.msra.mxu0 0.0
      %963 = vmatpush.xpose.msra.mxu0 %v946
      %964 = vmatmul.f32.gmra.mxu0 %v944
      %v965 = vpop.f32.mrf.mxu0
      %v966 = vadd.f32 0.0, %v965
      %967 = vdwg.mxu0
      %v968 = vsel %vm176, -1e+30, %v966
      %v969 = vsel %vm207, %v968, -inf
      %970 = vmax.xlane.f32.xlu0 %v969
      %v971 = vpop.xlane.xlu0 %970
      %v972 = vsub.f32 %v968, %v971
      %v973 = vmul.f32 %v972, 1.442695
      %v974 = vpow.pop %v973
      %v975 = vsel %vm207, %v974, 0.0
      %976 = vadd.xlane.f32.xlu0 %v975
      %v977 = vpop.xlane.xlu0 %976
      %v978 = vrcp.pop %v977
      %v979 = vmul.f32 %v977, %v978
      %v980 = vsub.f32 1.0, %v979
      %v981 = vmul.f32 %v978, %v980
      %v982 = vadd.f32 %v978, %v981
      %vm983 = vweird.f32 %v977
      %vm984 = vweird.f32 %v978
      %vm985 = vmor %vm983, %vm984
      %v986 = vsel %vm985, %v978, %v982
      %v987 = vand.u32 2147483647, %v977
      %vm988 = vcmp.eq.f32.partialorder %v987, 8.507059e+37
      %v989 = vand.u32 %v977, 2147483648
      %v990 = vor.u32 1.1754944e-38, %v989
      %v991 = vsel %vm988, %v990, %v986
      %v992 = vmul.f32 %v974, %v991
      %993 = vrot.lane.b32.xlu0 %v940, 120
      %v994 = vpop.permute.xlu0 %993
      %v997 = vsel %vm207, %v992, 0
      %999 = vmatpush.msra.mxu0 0.0
      %1000 = vmatpush.msra.mxu0 0.0
      %1001 = vmatpush.msra.mxu0 0.0
      %1002 = vmatpush.msra.mxu0 0.0
      %1003 = vmatpush.msra.mxu0 0.0
      %1004 = vmatpush.msra.mxu0 0.0
      %1005 = vmatpush.msra.mxu0 0.0
      %1006 = vmatpush.msra.mxu0 0.0
      %1007 = vmatpush.msra.mxu0 0.0
      %1008 = vmatpush.msra.mxu0 0.0
      %1009 = vmatpush.msra.mxu0 0.0
      %1010 = vmatpush.msra.mxu0 0.0
      %1011 = vmatpush.msra.mxu0 0.0
      %1012 = vmatpush.msra.mxu0 0.0
      %1013 = vmatpush.msra.mxu0 0.0
      %1014 = vmatpush.msra.mxu0 %v994
      %1015 = vmatmul.f32.gmra.mxu0 %v997
      %v1016 = vpop.f32.mrf.mxu0
      %v1017 = vadd.f32 0.0, %v1016
      %1018 = vdwg.mxu0
      %s1019 = scalar_lea.vmem %s1, 28
      %v1020 = vld [vmem:[%s1019] sm:$0xf]
      %v1022 = vsel %vm181, %v1017, 0
      %v1025 = vsel %vm344, %v1020, 0
      %1027 = vmatpush.msra.mxu0 0.0
      %1028 = vmatpush.msra.mxu0 0.0
      %1029 = vmatpush.msra.mxu0 0.0
      %1030 = vmatpush.msra.mxu0 0.0
      %1031 = vmatpush.msra.mxu0 0.0
      %1032 = vmatpush.msra.mxu0 0.0
      %1033 = vmatpush.msra.mxu0 0.0
      %1034 = vmatpush.msra.mxu0 0.0
      %1035 = vmatpush.msra.mxu0 0.0
      %1036 = vmatpush.msra.mxu0 0.0
      %1037 = vmatpush.msra.mxu0 0.0
      %1038 = vmatpush.msra.mxu0 0.0
      %1039 = vmatpush.msra.mxu0 0.0
      %1040 = vmatpush.msra.mxu0 0.0
      %1041 = vmatpush.msra.mxu0 0.0
      %1042 = vmatpush.msra.mxu0 %v1025
      %1043 = vmatmul.f32.gmra.mxu0 %v1022
      %v1044 = vpop.f32.mrf.mxu0
      %v1045 = vadd.f32 0.0, %v1044
      %1046 = vdwg.mxu0
      %v1047 = vadd.f32 %v938, %v1045
      %v1048 = vld [vmem:[%s2] sm:$0x1]
      %v1050 = vperm.slane %v1048, 0
      %v1052 = vadd.f32 %v1047, %v1050
      %1053 = vst.msk [vmem:[%s170] sm:$0xff] %vm181, %v1052
      %p1054 = scmp.lt.s32.totalorder %s14, 1
      %s1055 = scalar_select %p1054, %s14, 1
      %s1056 = smul.addr %s1055, 8
      %s1057 = scalar_lea.vmem %s3, %s1056
      // Predicated region
      $region33: #{self_attention_conv.3} parent=31 // pred_check
        %p1058 = pneg %p100
      $region34: #{self_attention_conv.3} parent=31 // pred_check_branch
        %1060 = sbr.rel (%p1058) target = $region36
      $region35: #{self_attention_conv.3} parent=31 // pred_region
        _
      $region36: #{self_attention_conv.3} parent=31 // pred_fallthru
        _
    $region32: #{self_attention_conv.3} parent=5 // pred_fallthru
      _
    %p1061 = scmp.le.s32.totalorder 2, %s9
    // Predicated region
    $region37: #{self_attention_conv.3} parent=5 // pred_check
      %p1062 = pneg %p1061
    $region38: #{self_attention_conv.3} parent=5 // pred_check_branch
      %1064 = sbr.rel (%p1062) target = $region40
    $region39: #{self_attention_conv.3} parent=5 // pred_region
      %s1065 = ssub.s32 %s9, 2
      // Predicated region
      $region41: #{self_attention_conv.3} parent=39 // pred_check
        %p1066 = pneg %p106
      $region42: #{self_attention_conv.3} parent=39 // pred_check_branch
        %1068 = sbr.rel (%p1066) target = $region44
      $region43: #{self_attention_conv.3} parent=39 // pred_region
        %p1069 = scmp.lt.s32.totalorder %s15, 1
        %s1070 = scalar_select %p1069, %s15, 1
        %s1071 = smul.addr %s1070, 8
        %s1072 = scalar_lea.vmem %s3, %s1071
      $region44: #{self_attention_conv.3} parent=39 // pred_fallthru
        _
    $region40: #{self_attention_conv.3} parent=5 // pred_fallthru
      _
  $region6: #{self_attention_conv.3} parent=0 // loop_footer
    %s13 = sadd.s32 1, %s9
  $region7: #{self_attention_conv.3} parent=0 // loop_footer_branch
    %8 = sbr.rel target = $region3
  $region8: #{self_attention_conv.3} parent=0 // loop_exit
    _

</llo_original>
